<compile_context>
chip_gen: v7x
topology: tpu7x:2x2x1
jax: 0.10.0
libtpu: 0.0.40
codegen_flags: <defaults>
</compile_context>

<pallas_src>
import functools

import numpy as np
import jax
import jax.numpy as jnp
from jax.experimental import pallas as pl


# ---------------------------------------------------------------------------
# Fused kernel: emb-add + Bottleneck x2 + final 1x1 conv/BN, whole batch.
# Layout: every activation is (channels, B*H*W) -- channels on sublanes, the
# fused batch*spatial axis on lanes (512 lanes => lane-dense, unmasked stores).
# ---------------------------------------------------------------------------
def _diffusion_kernel(x_ref, emb_ref, mask_ref,
                      w1_ref, s1_ref, w2_ref, s2_ref, w3_ref, s3_ref,
                      wf_ref, sf_ref, o_ref, *, H, W, cpad):
    f32, bf16 = jnp.float32, jnp.bfloat16
    M = H * W
    Mtot = x_ref.shape[1]
    B = Mtot // M

    # feat = noisy_image + time_embedding(t)[..., None, None]
    x = x_ref[...]                                     # (C, B*H*W) f32
    emb = emb_ref[...]                                 # (C, B)     f32
    feat = jnp.concatenate(
        [x[:, b * M:(b + 1) * M] + emb[:, b:b + 1] for b in range(B)], axis=1)

    masks = mask_ref[...]                              # (9, B*H*W) f32 0/1

    for i in range(2):                                 # the two Bottlenecks
        # --- 1x1 conv (BN folded) + shift + ReLU ---------------------------
        h = jnp.dot(w1_ref[i], feat.astype(bf16), preferred_element_type=f32)
        h = jnp.maximum(h + s1_ref[i], 0.0)            # (cmid, Mtot)
        hb = h.astype(bf16)

        # --- 3x3 conv, padding=1 -------------------------------------------
        # One MXU push computes all nine tap outputs at once (tap k lives in
        # rows [k*cpad, k*cpad + cmid); the remaining rows are zero padding
        # so every sublane slice below is tile aligned).  Each tap block is
        # then shifted to its output position along the lane axis and the
        # out-of-image columns are zeroed with the precomputed mask.
        y = jnp.dot(w2_ref[i], hb, preferred_element_type=f32)  # (9*cpad, Mtot)
        acc = y[4 * cpad:5 * cpad, :]                  # center tap: no shift/mask
        for k in range(9):
            if k == 4:
                continue
            dh, dw = k // 3 - 1, k % 3 - 1
            s = dh * W + dw                            # source = output + s
            blk = y[k * cpad:(k + 1) * cpad, :]        # aligned (cpad, Mtot)
            shifted = jnp.roll(blk, -s, axis=1)        # shifted[:, m] = blk[:, m+s]
            acc = acc + masks[k:k + 1, :] * shifted
        h2 = jnp.maximum(acc + s2_ref[i], 0.0)         # (cpad, Mtot); pad rows 0

        # --- 1x1 conv (BN folded) + residual (no ReLU, as in reference) ----
        out = jnp.dot(w3_ref[i], h2.astype(bf16), preferred_element_type=f32)
        feat = out + s3_ref[i] + feat

    # --- final 1x1 conv + BN -------------------------------------------------
    yf = jnp.dot(wf_ref[...], feat.astype(bf16), preferred_element_type=f32)
    o_ref[...] = (yf + sf_ref[...]).astype(o_ref.dtype)


# ---------------------------------------------------------------------------
# Wrapper
# ---------------------------------------------------------------------------
def _make_tap_masks(B, H, W):
    """mask[k, b*H*W + h*W + w] = 1 iff tap k's source pixel is inside the
    image (i.e. the PyTorch zero padding does not apply).  Built with numpy
    once per trace -- nothing spatial is rebuilt inside the kernel."""
    idx = np.arange(B * H * W)
    hh = (idx // W) % H
    ww = idx % W
    masks = []
    for kh in range(3):
        for kw in range(3):
            dh, dw = kh - 1, kw - 1
            ok = ((hh + dh >= 0) & (hh + dh < H) &
                  (ww + dw >= 0) & (ww + dw < W))
            masks.append(ok.astype(np.float32))
    return jnp.asarray(np.stack(masks))                # (9, B*H*W)


@jax.jit
def diffusion_model_forward(params, noisy_image, t):
    B, C, H, W = noisy_image.shape
    Mtot = B * H * W
    cpad = params["s2"].shape[1]

    # nn.Embedding row gather stays as one tiny XLA gather (wrapper glue).
    emb = params["time_embedding"][t.astype(jnp.int32)]           # (B, C)
    emb_t = emb.T.astype(jnp.float32)                             # (C, B)

    # NCHW -> (C, B*H*W): channels on sublanes, batch*spatial on lanes.
    x = jnp.transpose(noisy_image.astype(jnp.float32),
                      (1, 0, 2, 3)).reshape(C, Mtot)
    masks = _make_tap_masks(B, H, W)

    kernel = functools.partial(_diffusion_kernel, H=H, W=W, cpad=cpad)
    out = pl.pallas_call(          # no grid: the whole problem (~100 KiB) fits
        kernel,                    # in VMEM for a single invocation
        out_shape=jax.ShapeDtypeStruct((C, Mtot), jnp.float32),
    )(x, emb_t, masks,
      params["w1"], params["s1"], params["w2a"], params["s2"],
      params["w3"], params["s3"], params["wf"], params["sf"])

    return jnp.transpose(out.reshape(C, B, H, W), (1, 0, 2, 3))


# ---------------------------------------------------------------------------
# Parameter init (BN scale folded into the conv weights at init time)
# ---------------------------------------------------------------------------
def _fold_conv_bn(key, cin, cout, ksize, eps=1e-5):
    """Random Conv2d(+bias)+BatchNorm2d params with eval-mode BN folded in:
       y = (s*W) * x + (s*(b - mean) + beta),   s = gamma / sqrt(var + eps)."""
    kw_, kb_, kg_, kbt_, km_, kv_ = jax.random.split(key, 6)
    w = jax.random.normal(kw_, (cout, cin, ksize, ksize), jnp.float32) * 0.1
    b = jax.random.normal(kb_, (cout,), jnp.float32) * 0.05
    gamma = 1.0 + 0.1 * jax.random.normal(kg_, (cout,), jnp.float32)
    beta = 0.05 * jax.random.normal(kbt_, (cout,), jnp.float32)
    mean = 0.05 * jax.random.normal(km_, (cout,), jnp.float32)
    var = 1.0 + 0.1 * jnp.abs(jax.random.normal(kv_, (cout,), jnp.float32))
    s = gamma / jnp.sqrt(var + eps)
    shift = (s * (b - mean) + beta).reshape(cout, 1)
    w_folded = s[:, None, None, None] * w
    if ksize == 1:
        return w_folded[:, :, 0, 0], shift               # (cout, cin), (cout, 1)
    # tap ordering k = kh*3 + kw, each tap (cout, cin)
    w_taps = jnp.transpose(w_folded, (2, 3, 0, 1)).reshape(ksize * ksize, cout, cin)
    return w_taps, shift


def init_diffusion_model(key, channels_in, reduction=4, cpad=8):
    C = channels_in
    cmid = C // reduction
    k_emb, kb1, kb2, kf = jax.random.split(key, 4)
    emb = jax.random.normal(k_emb, (1280, C), jnp.float32) * 0.1

    def bottleneck(k):
        k1, k2, k3 = jax.random.split(k, 3)
        w1, s1 = _fold_conv_bn(k1, C, cmid, 1)
        w2t, s2 = _fold_conv_bn(k2, cmid, cmid, 3)          # (9, cmid, cmid)
        w3, s3 = _fold_conv_bn(k3, cmid, C, 1)
        # Zero-pad every tap's output rows to `cpad` so the kernel's sublane
        # slices of the tap-matmul result are (8,128)-tile aligned.
        w2a = jnp.zeros((9, cpad, cmid), jnp.float32).at[:, :cmid, :].set(w2t)
        w2a = w2a.reshape(9 * cpad, cmid)
        s2p = jnp.zeros((cpad, 1), jnp.float32).at[:cmid].set(s2)
        w3p = jnp.zeros((C, cpad), jnp.float32).at[:, :cmid].set(w3)
        return dict(w1=w1, s1=s1, w2a=w2a, s2=s2p, w3=w3p, s3=s3)

    b1, b2 = bottleneck(kb1), bottleneck(kb2)
    wf, sf = _fold_conv_bn(kf, C, C, 1)

    st = lambda n: jnp.stack([b1[n], b2[n]], axis=0)
    return {
        "time_embedding": emb,
        "w1": st("w1").astype(jnp.bfloat16), "s1": st("s1"),
        "w2a": st("w2a").astype(jnp.bfloat16), "s2": st("s2"),
        "w3": st("w3").astype(jnp.bfloat16), "s3": st("s3"),
        "wf": wf.astype(jnp.bfloat16), "sf": sf,
    }


# ---------------------------------------------------------------------------
# Pure-JAX/XLA reference (lax.conv) using the same BN-folded bf16 weights and
# the same bf16 cast of every matmul/conv input as the kernel.
# ---------------------------------------------------------------------------
def _reference_forward(params, noisy_image, t):
    f32, bf16 = jnp.float32, jnp.bfloat16
    cmid = params["w1"].shape[1]
    cpad = params["s2"].shape[1]

    q = lambda a: a.astype(bf16).astype(f32)

    def conv1x1(x, w, s):                    # w (cout, cin) bf16, s (cout, 1)
        y = jnp.einsum("oc,bchw->bohw", w.astype(f32), q(x))
        return y + s.reshape(1, -1, 1, 1)

    def conv3x3(x, w_taps, s):               # w_taps (9, cout, cin) bf16
        w4 = jnp.transpose(w_taps.reshape(3, 3, cmid, cmid), (2, 3, 0, 1))
        y = jax.lax.conv_general_dilated(
            q(x), w4.astype(f32), window_strides=(1, 1), padding="SAME",
            dimension_numbers=("NCHW", "OIHW", "NCHW"))
        return y + s.reshape(1, -1, 1, 1)

    emb = params["time_embedding"][t.astype(jnp.int32)]
    feat = noisy_image.astype(f32) + emb[:, :, None, None]
    for i in range(2):
        w2_taps = params["w2a"][i].reshape(9, cpad, cmid)[:, :cmid, :]
        h = jax.nn.relu(conv1x1(feat, params["w1"][i], params["s1"][i]))
        h = jax.nn.relu(conv3x3(h, w2_taps, params["s2"][i][:cmid]))
        feat = conv1x1(h, params["w3"][i][:, :cmid], params["s3"][i]) + feat
    return conv1x1(feat, params["wf"], params["sf"])


if __name__ == "__main__":
    key = jax.random.PRNGKey(0)
    k_param, k_x = jax.random.split(key)

    B, C, H, W = 2, 16, 16, 16
    params = init_diffusion_model(k_param, channels_in=C)
    noisy_image = jax.random.normal(k_x, (B, C, H, W), jnp.float32)
    t = jnp.array([10, 500], dtype=jnp.int32)

    out = jax.block_until_ready(diffusion_model_forward(params, noisy_image, t))
    assert out.shape == (B, C, H, W)

    # Numerical self-check against the pure-JAX reference (same folded bf16
    # weights); validates the roll/mask 3x3-conv formulation end to end.
    ref = jax.block_until_ready(_reference_forward(params, noisy_image, t))
    err = float(jnp.max(jnp.abs(out - ref)))
    assert err < 1e-2, f"kernel/reference mismatch: max |err| = {err}"
    print("KERNEL_OK")
</pallas_src>

<mosaic_0001>
module attributes {stable_mosaic.version = 11 : i64} {
  func.func @_diffusion_kernel(%arg0: memref<16x512xf32, #tpu.memory_space<vmem>>, %arg1: memref<16x2xf32, #tpu.memory_space<vmem>>, %arg2: memref<9x512xf32, #tpu.memory_space<vmem>>, %arg3: memref<2x4x16xbf16, #tpu.memory_space<vmem>>, %arg4: memref<2x4x1xf32, #tpu.memory_space<vmem>>, %arg5: memref<2x72x4xbf16, #tpu.memory_space<vmem>>, %arg6: memref<2x8x1xf32, #tpu.memory_space<vmem>>, %arg7: memref<2x16x8xbf16, #tpu.memory_space<vmem>>, %arg8: memref<2x16x1xf32, #tpu.memory_space<vmem>>, %arg9: memref<16x16xbf16, #tpu.memory_space<vmem>>, %arg10: memref<16x1xf32, #tpu.memory_space<vmem>>, %arg11: memref<16x512xf32, #tpu.memory_space<vmem>>) attributes {dimension_semantics = [], scalar_prefetch = 0 : i64, scratch_operands = 0 : i64, tpu.core_type = #tpu.core_type<tc>} {
    %c0 = arith.constant 0 : index
    %c0_0 = arith.constant 0 : index
    %0 = vector.load %arg0[%c0, %c0_0] : memref<16x512xf32, #tpu.memory_space<vmem>>, vector<16x512xf32>
    %c0_1 = arith.constant 0 : index
    %c0_2 = arith.constant 0 : index
    %1 = vector.load %arg1[%c0_1, %c0_2] : memref<16x2xf32, #tpu.memory_space<vmem>>, vector<16x2xf32>
    %2 = vector.extract_strided_slice %0 {offsets = [0, 0], sizes = [16, 256], strides = [1, 1]} : vector<16x512xf32> to vector<16x256xf32>
    %3 = vector.extract_strided_slice %1 {offsets = [0, 0], sizes = [16, 1], strides = [1, 1]} : vector<16x2xf32> to vector<16x1xf32>
    %4 = vector.broadcast %3 : vector<16x1xf32> to vector<16x256xf32>
    %5 = arith.addf %2, %4 : vector<16x256xf32>
    %6 = vector.extract_strided_slice %0 {offsets = [0, 256], sizes = [16, 256], strides = [1, 1]} : vector<16x512xf32> to vector<16x256xf32>
    %7 = vector.extract_strided_slice %1 {offsets = [0, 1], sizes = [16, 1], strides = [1, 1]} : vector<16x2xf32> to vector<16x1xf32>
    %8 = vector.broadcast %7 : vector<16x1xf32> to vector<16x256xf32>
    %9 = arith.addf %6, %8 : vector<16x256xf32>
    %10 = tpu.concatenate %5, %9 in 1 : vector<16x256xf32>, vector<16x256xf32> -> vector<16x512xf32>
    %c0_3 = arith.constant 0 : index
    %c0_4 = arith.constant 0 : index
    %11 = vector.load %arg2[%c0_3, %c0_4] : memref<9x512xf32, #tpu.memory_space<vmem>>, vector<9x512xf32>
    %c0_5 = arith.constant 0 : index
    %c0_6 = arith.constant 0 : index
    %c0_7 = arith.constant 0 : index
    %12 = vector.load %arg3[%c0_5, %c0_6, %c0_7] : memref<2x4x16xbf16, #tpu.memory_space<vmem>>, vector<1x4x16xbf16>
    %13 = vector.shape_cast %12 : vector<1x4x16xbf16> to vector<4x16xbf16>
    %14 = arith.truncf %10 : vector<16x512xf32> to vector<16x512xbf16>
    %cst = arith.constant dense<0.000000e+00> : vector<4x512xf32>
    %15 = tpu.matmul %13, %14, %cst {dimension_numbers = #tpu.dot_dimension_numbers<[1], [0], [0], [1], [0, 0, 1, 1], [], []>} : vector<4x16xbf16>, vector<16x512xbf16>, vector<4x512xf32> -> vector<4x512xf32>
    %c0_8 = arith.constant 0 : index
    %c0_9 = arith.constant 0 : index
    %c0_10 = arith.constant 0 : index
    %16 = vector.load %arg4[%c0_8, %c0_9, %c0_10] : memref<2x4x1xf32, #tpu.memory_space<vmem>>, vector<1x4x1xf32>
    %17 = vector.shape_cast %16 : vector<1x4x1xf32> to vector<4x1xf32>
    %18 = vector.broadcast %17 : vector<4x1xf32> to vector<4x512xf32>
    %19 = arith.addf %15, %18 : vector<4x512xf32>
    %cst_11 = arith.constant 0.000000e+00 : f32
    %20 = vector.broadcast %cst_11 : f32 to vector<4x512xf32>
    %21 = arith.maximumf %19, %20 : vector<4x512xf32>
    %22 = arith.truncf %21 : vector<4x512xf32> to vector<4x512xbf16>
    %c0_12 = arith.constant 0 : index
    %c0_13 = arith.constant 0 : index
    %c0_14 = arith.constant 0 : index
    %23 = vector.load %arg5[%c0_12, %c0_13, %c0_14] : memref<2x72x4xbf16, #tpu.memory_space<vmem>>, vector<1x72x4xbf16>
    %24 = vector.shape_cast %23 : vector<1x72x4xbf16> to vector<72x4xbf16>
    %cst_15 = arith.constant dense<0.000000e+00> : vector<72x512xf32>
    %25 = tpu.matmul %24, %22, %cst_15 {dimension_numbers = #tpu.dot_dimension_numbers<[1], [0], [0], [1], [0, 0, 1, 1], [], []>} : vector<72x4xbf16>, vector<4x512xbf16>, vector<72x512xf32> -> vector<72x512xf32>
    %26 = vector.extract_strided_slice %25 {offsets = [32, 0], sizes = [8, 512], strides = [1, 1]} : vector<72x512xf32> to vector<8x512xf32>
    %27 = vector.extract_strided_slice %25 {offsets = [0, 0], sizes = [8, 512], strides = [1, 1]} : vector<72x512xf32> to vector<8x512xf32>
    %28 = vector.extract_strided_slice %27 {offsets = [0, 495], sizes = [8, 17], strides = [1, 1]} : vector<8x512xf32> to vector<8x17xf32>
    %29 = vector.extract_strided_slice %27 {offsets = [0, 0], sizes = [8, 495], strides = [1, 1]} : vector<8x512xf32> to vector<8x495xf32>
    %30 = tpu.concatenate %28, %29 in 1 : vector<8x17xf32>, vector<8x495xf32> -> vector<8x512xf32>
    %31 = vector.extract_strided_slice %11 {offsets = [0, 0], sizes = [1, 512], strides = [1, 1]} : vector<9x512xf32> to vector<1x512xf32>
    %32 = vector.broadcast %31 : vector<1x512xf32> to vector<8x512xf32>
    %33 = arith.mulf %32, %30 : vector<8x512xf32>
    %34 = arith.addf %26, %33 : vector<8x512xf32>
    %35 = vector.extract_strided_slice %25 {offsets = [8, 0], sizes = [8, 512], strides = [1, 1]} : vector<72x512xf32> to vector<8x512xf32>
    %36 = vector.extract_strided_slice %35 {offsets = [0, 496], sizes = [8, 16], strides = [1, 1]} : vector<8x512xf32> to vector<8x16xf32>
    %37 = vector.extract_strided_slice %35 {offsets = [0, 0], sizes = [8, 496], strides = [1, 1]} : vector<8x512xf32> to vector<8x496xf32>
    %38 = tpu.concatenate %36, %37 in 1 : vector<8x16xf32>, vector<8x496xf32> -> vector<8x512xf32>
    %39 = vector.extract_strided_slice %11 {offsets = [1, 0], sizes = [1, 512], strides = [1, 1]} : vector<9x512xf32> to vector<1x512xf32>
    %40 = vector.broadcast %39 : vector<1x512xf32> to vector<8x512xf32>
    %41 = arith.mulf %40, %38 : vector<8x512xf32>
    %42 = arith.addf %34, %41 : vector<8x512xf32>
    %43 = vector.extract_strided_slice %25 {offsets = [16, 0], sizes = [8, 512], strides = [1, 1]} : vector<72x512xf32> to vector<8x512xf32>
    %44 = vector.extract_strided_slice %43 {offsets = [0, 497], sizes = [8, 15], strides = [1, 1]} : vector<8x512xf32> to vector<8x15xf32>
    %45 = vector.extract_strided_slice %43 {offsets = [0, 0], sizes = [8, 497], strides = [1, 1]} : vector<8x512xf32> to vector<8x497xf32>
    %46 = tpu.concatenate %44, %45 in 1 : vector<8x15xf32>, vector<8x497xf32> -> vector<8x512xf32>
    %47 = vector.extract_strided_slice %11 {offsets = [2, 0], sizes = [1, 512], strides = [1, 1]} : vector<9x512xf32> to vector<1x512xf32>
    %48 = vector.broadcast %47 : vector<1x512xf32> to vector<8x512xf32>
    %49 = arith.mulf %48, %46 : vector<8x512xf32>
    %50 = arith.addf %42, %49 : vector<8x512xf32>
    %51 = vector.extract_strided_slice %25 {offsets = [24, 0], sizes = [8, 512], strides = [1, 1]} : vector<72x512xf32> to vector<8x512xf32>
    %52 = vector.extract_strided_slice %51 {offsets = [0, 511], sizes = [8, 1], strides = [1, 1]} : vector<8x512xf32> to vector<8x1xf32>
    %53 = vector.extract_strided_slice %51 {offsets = [0, 0], sizes = [8, 511], strides = [1, 1]} : vector<8x512xf32> to vector<8x511xf32>
    %54 = tpu.concatenate %52, %53 in 1 : vector<8x1xf32>, vector<8x511xf32> -> vector<8x512xf32>
    %55 = vector.extract_strided_slice %11 {offsets = [3, 0], sizes = [1, 512], strides = [1, 1]} : vector<9x512xf32> to vector<1x512xf32>
    %56 = vector.broadcast %55 : vector<1x512xf32> to vector<8x512xf32>
    %57 = arith.mulf %56, %54 : vector<8x512xf32>
    %58 = arith.addf %50, %57 : vector<8x512xf32>
    %59 = vector.extract_strided_slice %25 {offsets = [40, 0], sizes = [8, 512], strides = [1, 1]} : vector<72x512xf32> to vector<8x512xf32>
    %60 = vector.extract_strided_slice %59 {offsets = [0, 1], sizes = [8, 511], strides = [1, 1]} : vector<8x512xf32> to vector<8x511xf32>
    %61 = vector.extract_strided_slice %59 {offsets = [0, 0], sizes = [8, 1], strides = [1, 1]} : vector<8x512xf32> to vector<8x1xf32>
    %62 = tpu.concatenate %60, %61 in 1 : vector<8x511xf32>, vector<8x1xf32> -> vector<8x512xf32>
    %63 = vector.extract_strided_slice %11 {offsets = [5, 0], sizes = [1, 512], strides = [1, 1]} : vector<9x512xf32> to vector<1x512xf32>
    %64 = vector.broadcast %63 : vector<1x512xf32> to vector<8x512xf32>
    %65 = arith.mulf %64, %62 : vector<8x512xf32>
    %66 = arith.addf %58, %65 : vector<8x512xf32>
    %67 = vector.extract_strided_slice %25 {offsets = [48, 0], sizes = [8, 512], strides = [1, 1]} : vector<72x512xf32> to vector<8x512xf32>
    %68 = vector.extract_strided_slice %67 {offsets = [0, 15], sizes = [8, 497], strides = [1, 1]} : vector<8x512xf32> to vector<8x497xf32>
    %69 = vector.extract_strided_slice %67 {offsets = [0, 0], sizes = [8, 15], strides = [1, 1]} : vector<8x512xf32> to vector<8x15xf32>
    %70 = tpu.concatenate %68, %69 in 1 : vector<8x497xf32>, vector<8x15xf32> -> vector<8x512xf32>
    %71 = vector.extract_strided_slice %11 {offsets = [6, 0], sizes = [1, 512], strides = [1, 1]} : vector<9x512xf32> to vector<1x512xf32>
    %72 = vector.broadcast %71 : vector<1x512xf32> to vector<8x512xf32>
    %73 = arith.mulf %72, %70 : vector<8x512xf32>
    %74 = arith.addf %66, %73 : vector<8x512xf32>
    %75 = vector.extract_strided_slice %25 {offsets = [56, 0], sizes = [8, 512], strides = [1, 1]} : vector<72x512xf32> to vector<8x512xf32>
    %76 = vector.extract_strided_slice %75 {offsets = [0, 16], sizes = [8, 496], strides = [1, 1]} : vector<8x512xf32> to vector<8x496xf32>
    %77 = vector.extract_strided_slice %75 {offsets = [0, 0], sizes = [8, 16], strides = [1, 1]} : vector<8x512xf32> to vector<8x16xf32>
    %78 = tpu.concatenate %76, %77 in 1 : vector<8x496xf32>, vector<8x16xf32> -> vector<8x512xf32>
    %79 = vector.extract_strided_slice %11 {offsets = [7, 0], sizes = [1, 512], strides = [1, 1]} : vector<9x512xf32> to vector<1x512xf32>
    %80 = vector.broadcast %79 : vector<1x512xf32> to vector<8x512xf32>
    %81 = arith.mulf %80, %78 : vector<8x512xf32>
    %82 = arith.addf %74, %81 : vector<8x512xf32>
    %83 = vector.extract_strided_slice %25 {offsets = [64, 0], sizes = [8, 512], strides = [1, 1]} : vector<72x512xf32> to vector<8x512xf32>
    %84 = vector.extract_strided_slice %83 {offsets = [0, 17], sizes = [8, 495], strides = [1, 1]} : vector<8x512xf32> to vector<8x495xf32>
    %85 = vector.extract_strided_slice %83 {offsets = [0, 0], sizes = [8, 17], strides = [1, 1]} : vector<8x512xf32> to vector<8x17xf32>
    %86 = tpu.concatenate %84, %85 in 1 : vector<8x495xf32>, vector<8x17xf32> -> vector<8x512xf32>
    %87 = vector.extract_strided_slice %11 {offsets = [8, 0], sizes = [1, 512], strides = [1, 1]} : vector<9x512xf32> to vector<1x512xf32>
    %88 = vector.broadcast %87 : vector<1x512xf32> to vector<8x512xf32>
    %89 = arith.mulf %88, %86 : vector<8x512xf32>
    %90 = arith.addf %82, %89 : vector<8x512xf32>
    %c0_16 = arith.constant 0 : index
    %c0_17 = arith.constant 0 : index
    %c0_18 = arith.constant 0 : index
    %91 = vector.load %arg6[%c0_16, %c0_17, %c0_18] : memref<2x8x1xf32, #tpu.memory_space<vmem>>, vector<1x8x1xf32>
    %92 = vector.shape_cast %91 : vector<1x8x1xf32> to vector<8x1xf32>
    %93 = vector.broadcast %92 : vector<8x1xf32> to vector<8x512xf32>
    %94 = arith.addf %90, %93 : vector<8x512xf32>
    %cst_19 = arith.constant 0.000000e+00 : f32
    %95 = vector.broadcast %cst_19 : f32 to vector<8x512xf32>
    %96 = arith.maximumf %94, %95 : vector<8x512xf32>
    %c0_20 = arith.constant 0 : index
    %c0_21 = arith.constant 0 : index
    %c0_22 = arith.constant 0 : index
    %97 = vector.load %arg7[%c0_20, %c0_21, %c0_22] : memref<2x16x8xbf16, #tpu.memory_space<vmem>>, vector<1x16x8xbf16>
    %98 = vector.shape_cast %97 : vector<1x16x8xbf16> to vector<16x8xbf16>
    %99 = arith.truncf %96 : vector<8x512xf32> to vector<8x512xbf16>
    %cst_23 = arith.constant dense<0.000000e+00> : vector<16x512xf32>
    %100 = tpu.matmul %98, %99, %cst_23 {dimension_numbers = #tpu.dot_dimension_numbers<[1], [0], [0], [1], [0, 0, 1, 1], [], []>} : vector<16x8xbf16>, vector<8x512xbf16>, vector<16x512xf32> -> vector<16x512xf32>
    %c0_24 = arith.constant 0 : index
    %c0_25 = arith.constant 0 : index
    %c0_26 = arith.constant 0 : index
    %101 = vector.load %arg8[%c0_24, %c0_25, %c0_26] : memref<2x16x1xf32, #tpu.memory_space<vmem>>, vector<1x16x1xf32>
    %102 = vector.shape_cast %101 : vector<1x16x1xf32> to vector<16x1xf32>
    %103 = vector.broadcast %102 : vector<16x1xf32> to vector<16x512xf32>
    %104 = arith.addf %100, %103 : vector<16x512xf32>
    %105 = arith.addf %104, %10 : vector<16x512xf32>
    %c1 = arith.constant 1 : index
    %c0_27 = arith.constant 0 : index
    %c0_28 = arith.constant 0 : index
    %106 = vector.load %arg3[%c1, %c0_27, %c0_28] : memref<2x4x16xbf16, #tpu.memory_space<vmem>>, vector<1x4x16xbf16>
    %107 = vector.shape_cast %106 : vector<1x4x16xbf16> to vector<4x16xbf16>
    %108 = arith.truncf %105 : vector<16x512xf32> to vector<16x512xbf16>
    %cst_29 = arith.constant dense<0.000000e+00> : vector<4x512xf32>
    %109 = tpu.matmul %107, %108, %cst_29 {dimension_numbers = #tpu.dot_dimension_numbers<[1], [0], [0], [1], [0, 0, 1, 1], [], []>} : vector<4x16xbf16>, vector<16x512xbf16>, vector<4x512xf32> -> vector<4x512xf32>
    %c1_30 = arith.constant 1 : index
    %c0_31 = arith.constant 0 : index
    %c0_32 = arith.constant 0 : index
    %110 = vector.load %arg4[%c1_30, %c0_31, %c0_32] : memref<2x4x1xf32, #tpu.memory_space<vmem>>, vector<1x4x1xf32>
    %111 = vector.shape_cast %110 : vector<1x4x1xf32> to vector<4x1xf32>
    %112 = vector.broadcast %111 : vector<4x1xf32> to vector<4x512xf32>
    %113 = arith.addf %109, %112 : vector<4x512xf32>
    %cst_33 = arith.constant 0.000000e+00 : f32
    %114 = vector.broadcast %cst_33 : f32 to vector<4x512xf32>
    %115 = arith.maximumf %113, %114 : vector<4x512xf32>
    %116 = arith.truncf %115 : vector<4x512xf32> to vector<4x512xbf16>
    %c1_34 = arith.constant 1 : index
    %c0_35 = arith.constant 0 : index
    %c0_36 = arith.constant 0 : index
    %117 = vector.load %arg5[%c1_34, %c0_35, %c0_36] : memref<2x72x4xbf16, #tpu.memory_space<vmem>>, vector<1x72x4xbf16>
    %118 = vector.shape_cast %117 : vector<1x72x4xbf16> to vector<72x4xbf16>
    %cst_37 = arith.constant dense<0.000000e+00> : vector<72x512xf32>
    %119 = tpu.matmul %118, %116, %cst_37 {dimension_numbers = #tpu.dot_dimension_numbers<[1], [0], [0], [1], [0, 0, 1, 1], [], []>} : vector<72x4xbf16>, vector<4x512xbf16>, vector<72x512xf32> -> vector<72x512xf32>
    %120 = vector.extract_strided_slice %119 {offsets = [32, 0], sizes = [8, 512], strides = [1, 1]} : vector<72x512xf32> to vector<8x512xf32>
    %121 = vector.extract_strided_slice %119 {offsets = [0, 0], sizes = [8, 512], strides = [1, 1]} : vector<72x512xf32> to vector<8x512xf32>
    %122 = vector.extract_strided_slice %121 {offsets = [0, 495], sizes = [8, 17], strides = [1, 1]} : vector<8x512xf32> to vector<8x17xf32>
    %123 = vector.extract_strided_slice %121 {offsets = [0, 0], sizes = [8, 495], strides = [1, 1]} : vector<8x512xf32> to vector<8x495xf32>
    %124 = tpu.concatenate %122, %123 in 1 : vector<8x17xf32>, vector<8x495xf32> -> vector<8x512xf32>
    %125 = vector.extract_strided_slice %11 {offsets = [0, 0], sizes = [1, 512], strides = [1, 1]} : vector<9x512xf32> to vector<1x512xf32>
    %126 = vector.broadcast %125 : vector<1x512xf32> to vector<8x512xf32>
    %127 = arith.mulf %126, %124 : vector<8x512xf32>
    %128 = arith.addf %120, %127 : vector<8x512xf32>
    %129 = vector.extract_strided_slice %119 {offsets = [8, 0], sizes = [8, 512], strides = [1, 1]} : vector<72x512xf32> to vector<8x512xf32>
    %130 = vector.extract_strided_slice %129 {offsets = [0, 496], sizes = [8, 16], strides = [1, 1]} : vector<8x512xf32> to vector<8x16xf32>
    %131 = vector.extract_strided_slice %129 {offsets = [0, 0], sizes = [8, 496], strides = [1, 1]} : vector<8x512xf32> to vector<8x496xf32>
    %132 = tpu.concatenate %130, %131 in 1 : vector<8x16xf32>, vector<8x496xf32> -> vector<8x512xf32>
    %133 = vector.extract_strided_slice %11 {offsets = [1, 0], sizes = [1, 512], strides = [1, 1]} : vector<9x512xf32> to vector<1x512xf32>
    %134 = vector.broadcast %133 : vector<1x512xf32> to vector<8x512xf32>
    %135 = arith.mulf %134, %132 : vector<8x512xf32>
    %136 = arith.addf %128, %135 : vector<8x512xf32>
    %137 = vector.extract_strided_slice %119 {offsets = [16, 0], sizes = [8, 512], strides = [1, 1]} : vector<72x512xf32> to vector<8x512xf32>
    %138 = vector.extract_strided_slice %137 {offsets = [0, 497], sizes = [8, 15], strides = [1, 1]} : vector<8x512xf32> to vector<8x15xf32>
    %139 = vector.extract_strided_slice %137 {offsets = [0, 0], sizes = [8, 497], strides = [1, 1]} : vector<8x512xf32> to vector<8x497xf32>
    %140 = tpu.concatenate %138, %139 in 1 : vector<8x15xf32>, vector<8x497xf32> -> vector<8x512xf32>
    %141 = vector.extract_strided_slice %11 {offsets = [2, 0], sizes = [1, 512], strides = [1, 1]} : vector<9x512xf32> to vector<1x512xf32>
    %142 = vector.broadcast %141 : vector<1x512xf32> to vector<8x512xf32>
    %143 = arith.mulf %142, %140 : vector<8x512xf32>
    %144 = arith.addf %136, %143 : vector<8x512xf32>
    %145 = vector.extract_strided_slice %119 {offsets = [24, 0], sizes = [8, 512], strides = [1, 1]} : vector<72x512xf32> to vector<8x512xf32>
    %146 = vector.extract_strided_slice %145 {offsets = [0, 511], sizes = [8, 1], strides = [1, 1]} : vector<8x512xf32> to vector<8x1xf32>
    %147 = vector.extract_strided_slice %145 {offsets = [0, 0], sizes = [8, 511], strides = [1, 1]} : vector<8x512xf32> to vector<8x511xf32>
    %148 = tpu.concatenate %146, %147 in 1 : vector<8x1xf32>, vector<8x511xf32> -> vector<8x512xf32>
    %149 = vector.extract_strided_slice %11 {offsets = [3, 0], sizes = [1, 512], strides = [1, 1]} : vector<9x512xf32> to vector<1x512xf32>
    %150 = vector.broadcast %149 : vector<1x512xf32> to vector<8x512xf32>
    %151 = arith.mulf %150, %148 : vector<8x512xf32>
    %152 = arith.addf %144, %151 : vector<8x512xf32>
    %153 = vector.extract_strided_slice %119 {offsets = [40, 0], sizes = [8, 512], strides = [1, 1]} : vector<72x512xf32> to vector<8x512xf32>
    %154 = vector.extract_strided_slice %153 {offsets = [0, 1], sizes = [8, 511], strides = [1, 1]} : vector<8x512xf32> to vector<8x511xf32>
    %155 = vector.extract_strided_slice %153 {offsets = [0, 0], sizes = [8, 1], strides = [1, 1]} : vector<8x512xf32> to vector<8x1xf32>
    %156 = tpu.concatenate %154, %155 in 1 : vector<8x511xf32>, vector<8x1xf32> -> vector<8x512xf32>
    %157 = vector.extract_strided_slice %11 {offsets = [5, 0], sizes = [1, 512], strides = [1, 1]} : vector<9x512xf32> to vector<1x512xf32>
    %158 = vector.broadcast %157 : vector<1x512xf32> to vector<8x512xf32>
    %159 = arith.mulf %158, %156 : vector<8x512xf32>
    %160 = arith.addf %152, %159 : vector<8x512xf32>
    %161 = vector.extract_strided_slice %119 {offsets = [48, 0], sizes = [8, 512], strides = [1, 1]} : vector<72x512xf32> to vector<8x512xf32>
    %162 = vector.extract_strided_slice %161 {offsets = [0, 15], sizes = [8, 497], strides = [1, 1]} : vector<8x512xf32> to vector<8x497xf32>
    %163 = vector.extract_strided_slice %161 {offsets = [0, 0], sizes = [8, 15], strides = [1, 1]} : vector<8x512xf32> to vector<8x15xf32>
    %164 = tpu.concatenate %162, %163 in 1 : vector<8x497xf32>, vector<8x15xf32> -> vector<8x512xf32>
    %165 = vector.extract_strided_slice %11 {offsets = [6, 0], sizes = [1, 512], strides = [1, 1]} : vector<9x512xf32> to vector<1x512xf32>
    %166 = vector.broadcast %165 : vector<1x512xf32> to vector<8x512xf32>
    %167 = arith.mulf %166, %164 : vector<8x512xf32>
    %168 = arith.addf %160, %167 : vector<8x512xf32>
    %169 = vector.extract_strided_slice %119 {offsets = [56, 0], sizes = [8, 512], strides = [1, 1]} : vector<72x512xf32> to vector<8x512xf32>
    %170 = vector.extract_strided_slice %169 {offsets = [0, 16], sizes = [8, 496], strides = [1, 1]} : vector<8x512xf32> to vector<8x496xf32>
    %171 = vector.extract_strided_slice %169 {offsets = [0, 0], sizes = [8, 16], strides = [1, 1]} : vector<8x512xf32> to vector<8x16xf32>
    %172 = tpu.concatenate %170, %171 in 1 : vector<8x496xf32>, vector<8x16xf32> -> vector<8x512xf32>
    %173 = vector.extract_strided_slice %11 {offsets = [7, 0], sizes = [1, 512], strides = [1, 1]} : vector<9x512xf32> to vector<1x512xf32>
    %174 = vector.broadcast %173 : vector<1x512xf32> to vector<8x512xf32>
    %175 = arith.mulf %174, %172 : vector<8x512xf32>
    %176 = arith.addf %168, %175 : vector<8x512xf32>
    %177 = vector.extract_strided_slice %119 {offsets = [64, 0], sizes = [8, 512], strides = [1, 1]} : vector<72x512xf32> to vector<8x512xf32>
    %178 = vector.extract_strided_slice %177 {offsets = [0, 17], sizes = [8, 495], strides = [1, 1]} : vector<8x512xf32> to vector<8x495xf32>
    %179 = vector.extract_strided_slice %177 {offsets = [0, 0], sizes = [8, 17], strides = [1, 1]} : vector<8x512xf32> to vector<8x17xf32>
    %180 = tpu.concatenate %178, %179 in 1 : vector<8x495xf32>, vector<8x17xf32> -> vector<8x512xf32>
    %181 = vector.extract_strided_slice %11 {offsets = [8, 0], sizes = [1, 512], strides = [1, 1]} : vector<9x512xf32> to vector<1x512xf32>
    %182 = vector.broadcast %181 : vector<1x512xf32> to vector<8x512xf32>
    %183 = arith.mulf %182, %180 : vector<8x512xf32>
    %184 = arith.addf %176, %183 : vector<8x512xf32>
    %c1_38 = arith.constant 1 : index
    %c0_39 = arith.constant 0 : index
    %c0_40 = arith.constant 0 : index
    %185 = vector.load %arg6[%c1_38, %c0_39, %c0_40] : memref<2x8x1xf32, #tpu.memory_space<vmem>>, vector<1x8x1xf32>
    %186 = vector.shape_cast %185 : vector<1x8x1xf32> to vector<8x1xf32>
    %187 = vector.broadcast %186 : vector<8x1xf32> to vector<8x512xf32>
    %188 = arith.addf %184, %187 : vector<8x512xf32>
    %cst_41 = arith.constant 0.000000e+00 : f32
    %189 = vector.broadcast %cst_41 : f32 to vector<8x512xf32>
    %190 = arith.maximumf %188, %189 : vector<8x512xf32>
    %c1_42 = arith.constant 1 : index
    %c0_43 = arith.constant 0 : index
    %c0_44 = arith.constant 0 : index
    %191 = vector.load %arg7[%c1_42, %c0_43, %c0_44] : memref<2x16x8xbf16, #tpu.memory_space<vmem>>, vector<1x16x8xbf16>
    %192 = vector.shape_cast %191 : vector<1x16x8xbf16> to vector<16x8xbf16>
    %193 = arith.truncf %190 : vector<8x512xf32> to vector<8x512xbf16>
    %cst_45 = arith.constant dense<0.000000e+00> : vector<16x512xf32>
    %194 = tpu.matmul %192, %193, %cst_45 {dimension_numbers = #tpu.dot_dimension_numbers<[1], [0], [0], [1], [0, 0, 1, 1], [], []>} : vector<16x8xbf16>, vector<8x512xbf16>, vector<16x512xf32> -> vector<16x512xf32>
    %c1_46 = arith.constant 1 : index
    %c0_47 = arith.constant 0 : index
    %c0_48 = arith.constant 0 : index
    %195 = vector.load %arg8[%c1_46, %c0_47, %c0_48] : memref<2x16x1xf32, #tpu.memory_space<vmem>>, vector<1x16x1xf32>
    %196 = vector.shape_cast %195 : vector<1x16x1xf32> to vector<16x1xf32>
    %197 = vector.broadcast %196 : vector<16x1xf32> to vector<16x512xf32>
    %198 = arith.addf %194, %197 : vector<16x512xf32>
    %199 = arith.addf %198, %105 : vector<16x512xf32>
    %c0_49 = arith.constant 0 : index
    %c0_50 = arith.constant 0 : index
    %200 = vector.load %arg9[%c0_49, %c0_50] : memref<16x16xbf16, #tpu.memory_space<vmem>>, vector<16x16xbf16>
    %201 = arith.truncf %199 : vector<16x512xf32> to vector<16x512xbf16>
    %cst_51 = arith.constant dense<0.000000e+00> : vector<16x512xf32>
    %202 = tpu.matmul %200, %201, %cst_51 {dimension_numbers = #tpu.dot_dimension_numbers<[1], [0], [0], [1], [0, 0, 1, 1], [], []>} : vector<16x16xbf16>, vector<16x512xbf16>, vector<16x512xf32> -> vector<16x512xf32>
    %c0_52 = arith.constant 0 : index
    %c0_53 = arith.constant 0 : index
    %203 = vector.load %arg10[%c0_52, %c0_53] : memref<16x1xf32, #tpu.memory_space<vmem>>, vector<16x1xf32>
    %204 = vector.broadcast %203 : vector<16x1xf32> to vector<16x512xf32>
    %205 = arith.addf %202, %204 : vector<16x512xf32>
    %c0_54 = arith.constant 0 : index
    %c0_55 = arith.constant 0 : index
    %206 = vector.load %arg11[%c0_54, %c0_55] : memref<16x512xf32, #tpu.memory_space<vmem>>, vector<16x512xf32>
    tpu.vector_store %arg11[%c0_54, %c0_55], %205 {strides = array<i32>} : memref<16x512xf32, #tpu.memory_space<vmem>>, vector<16x512xf32>,
    return
  }
}

</mosaic_0001>

<llo_original>
// kernel: diffusion_model_forward.1
$region0: #{diffusion_model_forward.1}
  #allocation0 [shape = 'u32[]', space=smem, size = 0x4, offset = 0x4, fixed_abs, tag = 'smem constant byte address 0x4 - core index']
  #allocation1 [shape = 'u32[144,128]{1,0:T(1,128)}', space=vmem, size = 0x12000, scoped, tag = 'internal scratch']
  %s0 = inlined_call_operand.vmem [shape: f32[16,512], index: 0, kind: input, shape index: {}]
  %s1 = inlined_call_operand.vmem [shape: f32[16,2], index: 1, kind: input, shape index: {}]
  %s2 = inlined_call_operand.vmem [shape: f32[9,512], index: 2, kind: input, shape index: {}]
  %s3 = inlined_call_operand.vmem [shape: bf16[2,4,16], index: 3, kind: input, shape index: {}]
  %s4 = inlined_call_operand.vmem [shape: f32[2,4,1], index: 4, kind: input, shape index: {}]
  %s5 = inlined_call_operand.vmem [shape: bf16[2,72,4], index: 5, kind: input, shape index: {}]
  %s6 = inlined_call_operand.vmem [shape: f32[2,8,1], index: 6, kind: input, shape index: {}]
  %s7 = inlined_call_operand.vmem [shape: bf16[2,16,8], index: 7, kind: input, shape index: {}]
  %s8 = inlined_call_operand.vmem [shape: f32[2,16,1], index: 8, kind: input, shape index: {}]
  %s9 = inlined_call_operand.vmem [shape: bf16[16,16], index: 9, kind: input, shape index: {}]
  %s10 = inlined_call_operand.vmem [shape: f32[16,1], index: 10, kind: input, shape index: {}]
  %s11 = inlined_call_operand.vmem [shape: f32[16,512], index: 11, kind: output, shape index: {}]
  %s12 = sld [smem:[#allocation0]]
  $region54: #{diffusion_model_forward.1} parent=0
    _
  %s14 = ssub.s32 1, %s12
  %s15 = scalar_select 0, %s14, %s12
  // Predicated region
  $region2: #{diffusion_model_forward.1} parent=0 // pred_check
    _
  $region3: #{diffusion_model_forward.1} parent=0 // pred_check_branch
    %17 = sbr.rel (0) target = $region5
  $region4: #{diffusion_model_forward.1} parent=0 // pred_region
    _
  $region5: #{diffusion_model_forward.1} parent=0 // pred_fallthru
    _
  // Predicated region
  $region6: #{diffusion_model_forward.1} parent=0 // pred_check
    _
  $region7: #{diffusion_model_forward.1} parent=0 // pred_check_branch
    %19 = sbr.rel (0) target = $region9
  $region8: #{diffusion_model_forward.1} parent=0 // pred_region
    _
  $region9: #{diffusion_model_forward.1} parent=0 // pred_fallthru
    _
  // Predicated region
  $region10: #{diffusion_model_forward.1} parent=0 // pred_check
    _
  $region11: #{diffusion_model_forward.1} parent=0 // pred_check_branch
    %21 = sbr.rel (0) target = $region13
  $region12: #{diffusion_model_forward.1} parent=0 // pred_region
    _
  $region13: #{diffusion_model_forward.1} parent=0 // pred_fallthru
    _
  // Predicated region
  $region14: #{diffusion_model_forward.1} parent=0 // pred_check
    _
  $region15: #{diffusion_model_forward.1} parent=0 // pred_check_branch
    %23 = sbr.rel (0) target = $region17
  $region16: #{diffusion_model_forward.1} parent=0 // pred_region
    _
  $region17: #{diffusion_model_forward.1} parent=0 // pred_fallthru
    _
  // Predicated region
  $region18: #{diffusion_model_forward.1} parent=0 // pred_check
    _
  $region19: #{diffusion_model_forward.1} parent=0 // pred_check_branch
    %25 = sbr.rel (0) target = $region21
  $region20: #{diffusion_model_forward.1} parent=0 // pred_region
    _
  $region21: #{diffusion_model_forward.1} parent=0 // pred_fallthru
    _
  // Predicated region
  $region22: #{diffusion_model_forward.1} parent=0 // pred_check
    _
  $region23: #{diffusion_model_forward.1} parent=0 // pred_check_branch
    %27 = sbr.rel (0) target = $region25
  $region24: #{diffusion_model_forward.1} parent=0 // pred_region
    _
  $region25: #{diffusion_model_forward.1} parent=0 // pred_fallthru
    _
  // Predicated region
  $region26: #{diffusion_model_forward.1} parent=0 // pred_check
    _
  $region27: #{diffusion_model_forward.1} parent=0 // pred_check_branch
    %29 = sbr.rel (0) target = $region29
  $region28: #{diffusion_model_forward.1} parent=0 // pred_region
    _
  $region29: #{diffusion_model_forward.1} parent=0 // pred_fallthru
    _
  // Predicated region
  $region30: #{diffusion_model_forward.1} parent=0 // pred_check
    _
  $region31: #{diffusion_model_forward.1} parent=0 // pred_check_branch
    %31 = sbr.rel (0) target = $region33
  $region32: #{diffusion_model_forward.1} parent=0 // pred_region
    _
  $region33: #{diffusion_model_forward.1} parent=0 // pred_fallthru
    _
  // Predicated region
  $region34: #{diffusion_model_forward.1} parent=0 // pred_check
    _
  $region35: #{diffusion_model_forward.1} parent=0 // pred_check_branch
    %33 = sbr.rel (0) target = $region37
  $region36: #{diffusion_model_forward.1} parent=0 // pred_region
    _
  $region37: #{diffusion_model_forward.1} parent=0 // pred_fallthru
    _
  // Predicated region
  $region38: #{diffusion_model_forward.1} parent=0 // pred_check
    _
  $region39: #{diffusion_model_forward.1} parent=0 // pred_check_branch
    %35 = sbr.rel (0) target = $region41
  $region40: #{diffusion_model_forward.1} parent=0 // pred_region
    _
  $region41: #{diffusion_model_forward.1} parent=0 // pred_fallthru
    _
  // Predicated region
  $region42: #{diffusion_model_forward.1} parent=0 // pred_check
    _
  $region43: #{diffusion_model_forward.1} parent=0 // pred_check_branch
    %37 = sbr.rel (0) target = $region45
  $region44: #{diffusion_model_forward.1} parent=0 // pred_region
    _
  $region45: #{diffusion_model_forward.1} parent=0 // pred_fallthru
    _
  %v39 = vld [vmem:[%s0] sm:$0xff]
  %v40 = vld [vmem:[%s0 + $0x8] sm:$0xff]
  %v41 = vld [vmem:[%s0 + $0x10] sm:$0xff]
  %v42 = vld [vmem:[%s0 + $0x18] sm:$0xff]
  %v43 = vld [vmem:[%s0 + $0x20] sm:$0xff]
  %v44 = vld [vmem:[%s0 + $0x28] sm:$0xff]
  %v45 = vld [vmem:[%s0 + $0x30] sm:$0xff]
  %v46 = vld [vmem:[%s0 + $0x38] sm:$0xff]
  %v47 = vld [vmem:[%s1] sm:$0xff]
  %v48 = vld [vmem:[%s1 + $0x8] sm:$0xff]
  %50 = vset.pattern.permute.xlu0 0
  %51 = vperm.xlu0 %50, %v47
  %v52 = vpop.permute.xlu0 %51
  %55 = vset.pattern.permute.xlu0 0
  %56 = vperm.xlu0 %55, %v48
  %v57 = vpop.permute.xlu0 %56
  %v59 = vadd.f32 %v39, %v52
  %v60 = vadd.f32 %v40, %v52
  %v61 = vadd.f32 %v43, %v57
  %v62 = vadd.f32 %v44, %v57
  %63 = vset.pattern.permute.xlu0 1
  %64 = vperm.xlu0 %63, %v47
  %v65 = vpop.permute.xlu0 %64
  %67 = vset.pattern.permute.xlu0 1
  %68 = vperm.xlu0 %67, %v48
  %v69 = vpop.permute.xlu0 %68
  %v71 = vadd.f32 %v41, %v65
  %v72 = vadd.f32 %v42, %v65
  %v73 = vadd.f32 %v45, %v69
  %v74 = vadd.f32 %v46, %v69
  %v75 = vld [vmem:[%s2] sm:$0xff]
  %v76 = vld [vmem:[%s2 + $0x8] sm:$0xff]
  %v77 = vld [vmem:[%s2 + $0x10] sm:$0xff]
  %v78 = vld [vmem:[%s2 + $0x18] sm:$0xff]
  %v79 = vld [vmem:[%s2 + $0x20] sm:$0x1]
  %v80 = vld [vmem:[%s2 + $0x28] sm:$0x1]
  %v81 = vld [vmem:[%s2 + $0x30] sm:$0x1]
  %v82 = vld [vmem:[%s2 + $0x38] sm:$0x1]
  %v83 = vld [vmem:[%s3] sm:$0x3]
  %v84 = vpack.c.bf16 %v61, %v59
  %v85 = vpack.c.bf16 %v62, %v60
  %v86 = vpack.c.bf16 %v73, %v71
  %v87 = vpack.c.bf16 %v74, %v72
  %v88 = vld [vmem:[%s4] sm:$0xf]
  %90 = vset.pattern.permute.xlu0 0
  %91 = vperm.xlu0 %90, %v88
  %v92 = vpop.permute.xlu0 %91
  %vm94 = vcmask 130048
  %v96 = vsel %vm94, %v83, 0
  %98 = vmatprep.subr.bf16.mxu0 %v85
  %99 = vmatpush1.bf16.msra.mxu0 %v84
  %100 = vmatprep.subr.bf16.mxu0 0
  %101 = vmatpush1.bf16.msra.mxu0 0
  %102 = vmatprep.subr.bf16.mxu0 0
  %103 = vmatpush1.bf16.msra.mxu0 0
  %104 = vmatprep.subr.bf16.mxu0 0
  %105 = vmatpush1.bf16.msra.mxu0 0
  %106 = vmatprep.subr.bf16.mxu0 0
  %107 = vmatpush1.bf16.msra.mxu0 0
  %108 = vmatprep.subr.bf16.mxu0 0
  %109 = vmatpush1.bf16.msra.mxu0 0
  %110 = vmatprep.subr.bf16.mxu0 0
  %111 = vmatpush1.bf16.msra.mxu0 0
  %112 = vmatprep.subr.bf16.mxu0 0
  %113 = vmatpush1.bf16.msra.mxu0 0
  %114 = vmatprep.subr.bf16.mxu0 0
  %115 = vmatpush1.bf16.msra.mxu0 0
  %116 = vmatprep.subr.bf16.mxu0 0
  %117 = vmatpush1.bf16.msra.mxu0 0
  %118 = vmatprep.subr.bf16.mxu0 0
  %119 = vmatpush1.bf16.msra.mxu0 0
  %120 = vmatprep.subr.bf16.mxu0 0
  %121 = vmatpush1.bf16.msra.mxu0 0
  %122 = vmatprep.subr.bf16.mxu0 0
  %123 = vmatpush1.bf16.msra.mxu0 0
  %124 = vmatprep.subr.bf16.mxu0 0
  %125 = vmatpush1.bf16.msra.mxu0 0
  %126 = vmatprep.subr.bf16.mxu0 0
  %127 = vmatpush1.bf16.msra.mxu0 0
  %128 = vmatprep.subr.bf16.mxu0 0
  %129 = vmatpush1.bf16.msra.mxu0 0
  %130 = vmatprep.mubr.bf16.mxu0 0
  %131 = vmatmul.mubr.bf16.gmra.mrb[0].mxu0 %v96
  %v132 = vpop.f32.mrb[0].mxu0
  %v133 = vadd.f32 %v92, %v132
  %v134 = vpop.f32.mrb[0].mxu0
  %v135 = vadd.f32 %v92, %v134
  %v136 = vpop.f32.mrb[0].mxu0
  %v137 = vpop.f32.mrb[0].mxu0
  %138 = vdwg.mxu0
  %139 = vmatprep.subr.bf16.mxu0 %v87
  %140 = vmatpush1.bf16.msra.mxu0 %v86
  %141 = vmatprep.subr.bf16.mxu0 0
  %142 = vmatpush1.bf16.msra.mxu0 0
  %143 = vmatprep.subr.bf16.mxu0 0
  %144 = vmatpush1.bf16.msra.mxu0 0
  %145 = vmatprep.subr.bf16.mxu0 0
  %146 = vmatpush1.bf16.msra.mxu0 0
  %147 = vmatprep.subr.bf16.mxu0 0
  %148 = vmatpush1.bf16.msra.mxu0 0
  %149 = vmatprep.subr.bf16.mxu0 0
  %150 = vmatpush1.bf16.msra.mxu0 0
  %151 = vmatprep.subr.bf16.mxu0 0
  %152 = vmatpush1.bf16.msra.mxu0 0
  %153 = vmatprep.subr.bf16.mxu0 0
  %154 = vmatpush1.bf16.msra.mxu0 0
  %155 = vmatprep.subr.bf16.mxu0 0
  %156 = vmatpush1.bf16.msra.mxu0 0
  %157 = vmatprep.subr.bf16.mxu0 0
  %158 = vmatpush1.bf16.msra.mxu0 0
  %159 = vmatprep.subr.bf16.mxu0 0
  %160 = vmatpush1.bf16.msra.mxu0 0
  %161 = vmatprep.subr.bf16.mxu0 0
  %162 = vmatpush1.bf16.msra.mxu0 0
  %163 = vmatprep.subr.bf16.mxu0 0
  %164 = vmatpush1.bf16.msra.mxu0 0
  %165 = vmatprep.subr.bf16.mxu0 0
  %166 = vmatpush1.bf16.msra.mxu0 0
  %167 = vmatprep.subr.bf16.mxu0 0
  %168 = vmatpush1.bf16.msra.mxu0 0
  %169 = vmatprep.subr.bf16.mxu0 0
  %170 = vmatpush1.bf16.msra.mxu0 0
  %171 = vmatprep.mubr.bf16.mxu0 0
  %172 = vmatmul.mubr.bf16.gmra.mrb[0].mxu0 %v96
  %v173 = vpop.f32.mrb[0].mxu0
  %v174 = vadd.f32 %v92, %v173
  %v175 = vpop.f32.mrb[0].mxu0
  %v176 = vadd.f32 %v92, %v175
  %v177 = vpop.f32.mrb[0].mxu0
  %v178 = vpop.f32.mrb[0].mxu0
  %179 = vdwg.mxu0
  %v180 = vmax.f32 %v133, 0.0
  %v181 = vmax.f32 %v135, 0.0
  %v182 = vmax.f32 %v174, 0.0
  %v183 = vmax.f32 %v176, 0.0
  %v184 = vpack.c.bf16 %v180, %v180
  %v185 = vpack.c.bf16 %v181, %v181
  %v186 = vpack.c.bf16 %v182, %v182
  %v187 = vpack.c.bf16 %v183, %v183
  %v188 = vld [vmem:[%s5] sm:$0xf]
  %v189 = vld [vmem:[%s5 + $0x4] sm:$0xf]
  %v190 = vld [vmem:[%s5 + $0x8] sm:$0xf]
  %v191 = vld [vmem:[%s5 + $0xc] sm:$0xf]
  %v192 = vld [vmem:[%s5 + $0x10] sm:$0xf]
  %v193 = vld [vmem:[%s5 + $0x14] sm:$0xf]
  %v194 = vld [vmem:[%s5 + $0x18] sm:$0xf]
  %v195 = vld [vmem:[%s5 + $0x1c] sm:$0xf]
  %v196 = vld [vmem:[%s5 + $0x20] sm:$0xf]
  %v206 = vunpack.c.l.b16 %v188
  %v207 = vunpack.c.l.b16 %v189
  %v208 = vunpack.c.l.b16 %v190
  %v209 = vunpack.c.l.b16 %v191
  %v210 = vunpack.c.l.b16 %v192
  %v211 = vunpack.c.l.b16 %v193
  %v212 = vunpack.c.l.b16 %v194
  %v213 = vunpack.c.l.b16 %v195
  %v214 = vunpack.c.l.b16 %v196
  %v215 = vpack.c.b16 %v207, %v206
  %v216 = vpack.c.b16 %v209, %v208
  %v217 = vpack.c.b16 %v211, %v210
  %v218 = vpack.c.b16 %v213, %v212
  %v219 = vpack.c.b16 %v214, %v214
  %vm220 = vcmask 31744
  %v222 = vsel %vm220, %v215, 0
  %v225 = vsel %vm220, %v216, 0
  %v228 = vsel %vm220, %v217, 0
  %v231 = vsel %vm220, %v218, 0
  %v234 = vsel %vm220, %v219, 0
  %vm236 = vcmask 1041408
  %v238 = vsel %vm236, %v184, 0
  %v241 = vsel %vm236, %v185, 0
  %v244 = vsel %vm236, %v186, 0
  %v247 = vsel %vm236, %v187, 0
  %249 = vmatprep.subr.bf16.mxu0 %v241
  %250 = vmatpush1.bf16.msra.mxu0 %v238
  %251 = vmatprep.subr.bf16.mxu0 0
  %252 = vmatpush1.bf16.msra.mxu0 0
  %253 = vmatprep.subr.bf16.mxu0 0
  %254 = vmatpush1.bf16.msra.mxu0 0
  %255 = vmatprep.subr.bf16.mxu0 0
  %256 = vmatpush1.bf16.msra.mxu0 0
  %257 = vmatprep.subr.bf16.mxu0 0
  %258 = vmatpush1.bf16.msra.mxu0 0
  %259 = vmatprep.subr.bf16.mxu0 0
  %260 = vmatpush1.bf16.msra.mxu0 0
  %261 = vmatprep.subr.bf16.mxu0 0
  %262 = vmatpush1.bf16.msra.mxu0 0
  %263 = vmatprep.subr.bf16.mxu0 0
  %264 = vmatpush1.bf16.msra.mxu0 0
  %265 = vmatprep.subr.bf16.mxu0 0
  %266 = vmatpush1.bf16.msra.mxu0 0
  %267 = vmatprep.subr.bf16.mxu0 0
  %268 = vmatpush1.bf16.msra.mxu0 0
  %269 = vmatprep.subr.bf16.mxu0 0
  %270 = vmatpush1.bf16.msra.mxu0 0
  %271 = vmatprep.subr.bf16.mxu0 0
  %272 = vmatpush1.bf16.msra.mxu0 0
  %273 = vmatprep.subr.bf16.mxu0 0
  %274 = vmatpush1.bf16.msra.mxu0 0
  %275 = vmatprep.subr.bf16.mxu0 0
  %276 = vmatpush1.bf16.msra.mxu0 0
  %277 = vmatprep.subr.bf16.mxu0 0
  %278 = vmatpush1.bf16.msra.mxu0 0
  %279 = vmatprep.subr.bf16.mxu0 0
  %280 = vmatpush1.bf16.msra.mxu0 0
  %281 = vmatprep.mubr.bf16.mxu0 0
  %282 = vmatmul.mubr.bf16.gmra.mrb[0].mxu0 %v222
  %v283 = vpop.f32.mrb[0].mxu0
  %v284 = vadd.f32 0.0, %v283
  %v285 = vpop.f32.mrb[0].mxu0
  %v286 = vadd.f32 0.0, %v285
  %v287 = vpop.f32.mrb[0].mxu0
  %v288 = vadd.f32 0.0, %v287
  %v289 = vpop.f32.mrb[0].mxu0
  %v290 = vadd.f32 0.0, %v289
  %291 = vmatprep.mubr.bf16.mxu0 0
  %292 = vmatmul.mubr.bf16.gmra.mrb[0].mxu0 %v225
  %v293 = vpop.f32.mrb[0].mxu0
  %v294 = vadd.f32 0.0, %v293
  %v295 = vpop.f32.mrb[0].mxu0
  %v296 = vadd.f32 0.0, %v295
  %v297 = vpop.f32.mrb[0].mxu0
  %v298 = vadd.f32 0.0, %v297
  %v299 = vpop.f32.mrb[0].mxu0
  %v300 = vadd.f32 0.0, %v299
  %301 = vmatprep.mubr.bf16.mxu0 0
  %302 = vmatmul.mubr.bf16.gmra.mrb[0].mxu0 %v228
  %v303 = vpop.f32.mrb[0].mxu0
  %v304 = vadd.f32 0.0, %v303
  %v305 = vpop.f32.mrb[0].mxu0
  %v306 = vadd.f32 0.0, %v305
  %v307 = vpop.f32.mrb[0].mxu0
  %v308 = vadd.f32 0.0, %v307
  %v309 = vpop.f32.mrb[0].mxu0
  %v310 = vadd.f32 0.0, %v309
  %311 = vmatprep.mubr.bf16.mxu0 0
  %312 = vmatmul.mubr.bf16.gmra.mrb[0].mxu0 %v231
  %v313 = vpop.f32.mrb[0].mxu0
  %v314 = vadd.f32 0.0, %v313
  %v315 = vpop.f32.mrb[0].mxu0
  %v316 = vadd.f32 0.0, %v315
  %v317 = vpop.f32.mrb[0].mxu0
  %v318 = vadd.f32 0.0, %v317
  %v319 = vpop.f32.mrb[0].mxu0
  %v320 = vadd.f32 0.0, %v319
  %321 = vmatprep.mubr.bf16.mxu0 0
  %322 = vmatmul.mubr.bf16.gmra.mrb[0].mxu0 %v234
  %v323 = vpop.f32.mrb[0].mxu0
  %v324 = vadd.f32 0.0, %v323
  %v325 = vpop.f32.mrb[0].mxu0
  %v326 = vadd.f32 0.0, %v325
  %v327 = vpop.f32.mrb[0].mxu0
  %v328 = vpop.f32.mrb[0].mxu0
  %329 = vdwg.mxu0
  %330 = vmatprep.subr.bf16.mxu0 %v247
  %331 = vmatpush1.bf16.msra.mxu0 %v244
  %332 = vmatprep.subr.bf16.mxu0 0
  %333 = vmatpush1.bf16.msra.mxu0 0
  %334 = vmatprep.subr.bf16.mxu0 0
  %335 = vmatpush1.bf16.msra.mxu0 0
  %336 = vmatprep.subr.bf16.mxu0 0
  %337 = vmatpush1.bf16.msra.mxu0 0
  %338 = vmatprep.subr.bf16.mxu0 0
  %339 = vmatpush1.bf16.msra.mxu0 0
  %340 = vmatprep.subr.bf16.mxu0 0
  %341 = vmatpush1.bf16.msra.mxu0 0
  %342 = vmatprep.subr.bf16.mxu0 0
  %343 = vmatpush1.bf16.msra.mxu0 0
  %344 = vmatprep.subr.bf16.mxu0 0
  %345 = vmatpush1.bf16.msra.mxu0 0
  %346 = vmatprep.subr.bf16.mxu0 0
  %347 = vmatpush1.bf16.msra.mxu0 0
  %348 = vmatprep.subr.bf16.mxu0 0
  %349 = vmatpush1.bf16.msra.mxu0 0
  %350 = vmatprep.subr.bf16.mxu0 0
  %351 = vmatpush1.bf16.msra.mxu0 0
  %352 = vmatprep.subr.bf16.mxu0 0
  %353 = vmatpush1.bf16.msra.mxu0 0
  %354 = vmatprep.subr.bf16.mxu0 0
  %355 = vmatpush1.bf16.msra.mxu0 0
  %356 = vmatprep.subr.bf16.mxu0 0
  %357 = vmatpush1.bf16.msra.mxu0 0
  %358 = vmatprep.subr.bf16.mxu0 0
  %359 = vmatpush1.bf16.msra.mxu0 0
  %360 = vmatprep.subr.bf16.mxu0 0
  %361 = vmatpush1.bf16.msra.mxu0 0
  %362 = vmatprep.mubr.bf16.mxu0 0
  %363 = vmatmul.mubr.bf16.gmra.mrb[0].mxu0 %v222
  %v364 = vpop.f32.mrb[0].mxu0
  %v365 = vadd.f32 0.0, %v364
  %v366 = vpop.f32.mrb[0].mxu0
  %v367 = vadd.f32 0.0, %v366
  %v368 = vpop.f32.mrb[0].mxu0
  %v369 = vadd.f32 0.0, %v368
  %v370 = vpop.f32.mrb[0].mxu0
  %v371 = vadd.f32 0.0, %v370
  %372 = vmatprep.mubr.bf16.mxu0 0
  %373 = vmatmul.mubr.bf16.gmra.mrb[0].mxu0 %v225
  %v374 = vpop.f32.mrb[0].mxu0
  %v375 = vadd.f32 0.0, %v374
  %v376 = vpop.f32.mrb[0].mxu0
  %v377 = vadd.f32 0.0, %v376
  %v378 = vpop.f32.mrb[0].mxu0
  %v379 = vadd.f32 0.0, %v378
  %v380 = vpop.f32.mrb[0].mxu0
  %v381 = vadd.f32 0.0, %v380
  %382 = vmatprep.mubr.bf16.mxu0 0
  %383 = vmatmul.mubr.bf16.gmra.mrb[0].mxu0 %v228
  %v384 = vpop.f32.mrb[0].mxu0
  %v385 = vadd.f32 0.0, %v384
  %v386 = vpop.f32.mrb[0].mxu0
  %v387 = vadd.f32 0.0, %v386
  %v388 = vpop.f32.mrb[0].mxu0
  %v389 = vadd.f32 0.0, %v388
  %v390 = vpop.f32.mrb[0].mxu0
  %v391 = vadd.f32 0.0, %v390
  %392 = vmatprep.mubr.bf16.mxu0 0
  %393 = vmatmul.mubr.bf16.gmra.mrb[0].mxu0 %v231
  %v394 = vpop.f32.mrb[0].mxu0
  %v395 = vadd.f32 0.0, %v394
  %v396 = vpop.f32.mrb[0].mxu0
  %v397 = vadd.f32 0.0, %v396
  %v398 = vpop.f32.mrb[0].mxu0
  %v399 = vadd.f32 0.0, %v398
  %v400 = vpop.f32.mrb[0].mxu0
  %v401 = vadd.f32 0.0, %v400
  %402 = vmatprep.mubr.bf16.mxu0 0
  %403 = vmatmul.mubr.bf16.gmra.mrb[0].mxu0 %v234
  %v404 = vpop.f32.mrb[0].mxu0
  %v405 = vadd.f32 0.0, %v404
  %v406 = vpop.f32.mrb[0].mxu0
  %v407 = vadd.f32 0.0, %v406
  %v408 = vpop.f32.mrb[0].mxu0
  %v409 = vpop.f32.mrb[0].mxu0
  %410 = vdwg.mxu0
  %412 = vrot.lane.b32.xlu0 %v367, 17
  %v413 = vpop.permute.xlu0 %412
  %418 = vrot.lane.b32.xlu0 %v284, 17
  %v419 = vpop.permute.xlu0 %418
  %420 = vrot.lane.b32.xlu0 %v286, 17
  %v421 = vpop.permute.xlu0 %420
  %422 = vrot.lane.b32.xlu0 %v365, 17
  %v423 = vpop.permute.xlu0 %422
  %vm424 = vcmask 138240
  %v425 = vsel %vm424, %v419, %v421
  %v426 = vsel %vm424, %v421, %v423
  %v427 = vsel %vm424, %v423, %v413
  %v432 = vsel %vm424, %v413, %v419
  %v433 = vlaneseq
  %v434 = vshrl.u32 %v433, 7
  %v435 = vsub.s32 0, %v434
  %v436 = vrot.slane %v75, %v435
  %v437 = vlaneseq
  %v438 = vshrl.u32 %v437, 7
  %v439 = vsub.s32 0, %v438
  %v440 = vrot.slane %v76, %v439
  %v441 = vlaneseq
  %v442 = vshrl.u32 %v441, 7
  %v443 = vsub.s32 0, %v442
  %v444 = vrot.slane %v77, %v443
  %v445 = vlaneseq
  %v446 = vshrl.u32 %v445, 7
  %v447 = vsub.s32 0, %v446
  %v448 = vrot.slane %v78, %v447
  %v449 = vmul.f32 %v436, %v432
  %v450 = vmul.f32 %v440, %v425
  %v451 = vmul.f32 %v444, %v426
  %v452 = vmul.f32 %v448, %v427
  %v453 = vadd.f32 %v304, %v449
  %v454 = vadd.f32 %v306, %v450
  %v455 = vadd.f32 %v385, %v451
  %v456 = vadd.f32 %v387, %v452
  %458 = vrot.lane.b32.xlu0 %v371, 16
  %v459 = vpop.permute.xlu0 %458
  %464 = vrot.lane.b32.xlu0 %v288, 16
  %v465 = vpop.permute.xlu0 %464
  %466 = vrot.lane.b32.xlu0 %v290, 16
  %v467 = vpop.permute.xlu0 %466
  %468 = vrot.lane.b32.xlu0 %v369, 16
  %v469 = vpop.permute.xlu0 %468
  %v470 = vsel %vm94, %v465, %v467
  %v471 = vsel %vm94, %v467, %v469
  %v472 = vsel %vm94, %v469, %v459
  %v477 = vsel %vm94, %v459, %v465
  %v478 = vlaneseq
  %v479 = vshrl.u32 %v478, 7
  %v480 = vsub.s32 1, %v479
  %v481 = vrot.slane %v75, %v480
  %v482 = vlaneseq
  %v483 = vshrl.u32 %v482, 7
  %v484 = vsub.s32 1, %v483
  %v485 = vrot.slane %v76, %v484
  %v486 = vlaneseq
  %v487 = vshrl.u32 %v486, 7
  %v488 = vsub.s32 1, %v487
  %v489 = vrot.slane %v77, %v488
  %v490 = vlaneseq
  %v491 = vshrl.u32 %v490, 7
  %v492 = vsub.s32 1, %v491
  %v493 = vrot.slane %v78, %v492
  %v494 = vmul.f32 %v481, %v477
  %v495 = vmul.f32 %v485, %v470
  %v496 = vmul.f32 %v489, %v471
  %v497 = vmul.f32 %v493, %v472
  %v498 = vadd.f32 %v453, %v494
  %v499 = vadd.f32 %v454, %v495
  %v500 = vadd.f32 %v455, %v496
  %v501 = vadd.f32 %v456, %v497
  %503 = vrot.lane.b32.xlu0 %v377, 15
  %v504 = vpop.permute.xlu0 %503
  %509 = vrot.lane.b32.xlu0 %v294, 15
  %v510 = vpop.permute.xlu0 %509
  %511 = vrot.lane.b32.xlu0 %v296, 15
  %v512 = vpop.permute.xlu0 %511
  %513 = vrot.lane.b32.xlu0 %v375, 15
  %v514 = vpop.permute.xlu0 %513
  %vm515 = vcmask 121856
  %v516 = vsel %vm515, %v510, %v512
  %v517 = vsel %vm515, %v512, %v514
  %v518 = vsel %vm515, %v514, %v504
  %v523 = vsel %vm515, %v504, %v510
  %v524 = vlaneseq
  %v525 = vshrl.u32 %v524, 7
  %v526 = vsub.s32 2, %v525
  %v527 = vrot.slane %v75, %v526
  %v528 = vlaneseq
  %v529 = vshrl.u32 %v528, 7
  %v530 = vsub.s32 2, %v529
  %v531 = vrot.slane %v76, %v530
  %v532 = vlaneseq
  %v533 = vshrl.u32 %v532, 7
  %v534 = vsub.s32 2, %v533
  %v535 = vrot.slane %v77, %v534
  %v536 = vlaneseq
  %v537 = vshrl.u32 %v536, 7
  %v538 = vsub.s32 2, %v537
  %v539 = vrot.slane %v78, %v538
  %v540 = vmul.f32 %v527, %v523
  %v541 = vmul.f32 %v531, %v516
  %v542 = vmul.f32 %v535, %v517
  %v543 = vmul.f32 %v539, %v518
  %v544 = vadd.f32 %v498, %v540
  %v545 = vadd.f32 %v499, %v541
  %v546 = vadd.f32 %v500, %v542
  %v547 = vadd.f32 %v501, %v543
  %549 = vrot.lane.b32.xlu0 %v381, 1
  %v550 = vpop.permute.xlu0 %549
  %555 = vrot.lane.b32.xlu0 %v298, 1
  %v556 = vpop.permute.xlu0 %555
  %557 = vrot.lane.b32.xlu0 %v300, 1
  %v558 = vpop.permute.xlu0 %557
  %559 = vrot.lane.b32.xlu0 %v379, 1
  %v560 = vpop.permute.xlu0 %559
  %vm561 = vcmask 7168
  %v562 = vsel %vm561, %v556, %v558
  %v563 = vsel %vm561, %v558, %v560
  %v564 = vsel %vm561, %v560, %v550
  %v569 = vsel %vm561, %v550, %v556
  %v570 = vlaneseq
  %v571 = vshrl.u32 %v570, 7
  %v572 = vsub.s32 3, %v571
  %v573 = vrot.slane %v75, %v572
  %v574 = vlaneseq
  %v575 = vshrl.u32 %v574, 7
  %v576 = vsub.s32 3, %v575
  %v577 = vrot.slane %v76, %v576
  %v578 = vlaneseq
  %v579 = vshrl.u32 %v578, 7
  %v580 = vsub.s32 3, %v579
  %v581 = vrot.slane %v77, %v580
  %v582 = vlaneseq
  %v583 = vshrl.u32 %v582, 7
  %v584 = vsub.s32 3, %v583
  %v585 = vrot.slane %v78, %v584
  %v586 = vmul.f32 %v573, %v569
  %v587 = vmul.f32 %v577, %v562
  %v588 = vmul.f32 %v581, %v563
  %v589 = vmul.f32 %v585, %v564
  %v590 = vadd.f32 %v544, %v586
  %v591 = vadd.f32 %v545, %v587
  %v592 = vadd.f32 %v546, %v588
  %v593 = vadd.f32 %v547, %v589
  %598 = vrot.lane.b32.xlu0 %v308, 127
  %v599 = vpop.permute.xlu0 %598
  %600 = vrot.lane.b32.xlu0 %v310, 127
  %v601 = vpop.permute.xlu0 %600
  %602 = vrot.lane.b32.xlu0 %v389, 127
  %v603 = vpop.permute.xlu0 %602
  %604 = vrot.lane.b32.xlu0 %v391, 127
  %v605 = vpop.permute.xlu0 %604
  %vm606 = vcmask 1039360
  %v607 = vsel %vm606, %v599, %v601
  %v608 = vsel %vm606, %v601, %v603
  %v609 = vsel %vm606, %v603, %v605
  %v615 = vsel %vm606, %v605, %v599
  %v616 = vlaneseq
  %v617 = vshrl.u32 %v616, 7
  %v618 = vsub.s32 5, %v617
  %v619 = vrot.slane %v75, %v618
  %v620 = vlaneseq
  %v621 = vshrl.u32 %v620, 7
  %v622 = vsub.s32 5, %v621
  %v623 = vrot.slane %v76, %v622
  %v624 = vlaneseq
  %v625 = vshrl.u32 %v624, 7
  %v626 = vsub.s32 5, %v625
  %v627 = vrot.slane %v77, %v626
  %v628 = vlaneseq
  %v629 = vshrl.u32 %v628, 7
  %v630 = vsub.s32 5, %v629
  %v631 = vrot.slane %v78, %v630
  %v632 = vmul.f32 %v619, %v607
  %v633 = vmul.f32 %v623, %v608
  %v634 = vmul.f32 %v627, %v609
  %v635 = vmul.f32 %v631, %v615
  %v636 = vadd.f32 %v590, %v632
  %v637 = vadd.f32 %v591, %v633
  %v638 = vadd.f32 %v592, %v634
  %v639 = vadd.f32 %v593, %v635
  %644 = vrot.lane.b32.xlu0 %v314, 113
  %v645 = vpop.permute.xlu0 %644
  %646 = vrot.lane.b32.xlu0 %v316, 113
  %v647 = vpop.permute.xlu0 %646
  %648 = vrot.lane.b32.xlu0 %v395, 113
  %v649 = vpop.permute.xlu0 %648
  %650 = vrot.lane.b32.xlu0 %v397, 113
  %v651 = vpop.permute.xlu0 %650
  %vm652 = vcmask 924672
  %v653 = vsel %vm652, %v645, %v647
  %v654 = vsel %vm652, %v647, %v649
  %v655 = vsel %vm652, %v649, %v651
  %v661 = vsel %vm652, %v651, %v645
  %v662 = vlaneseq
  %v663 = vshrl.u32 %v662, 7
  %v664 = vsub.s32 6, %v663
  %v665 = vrot.slane %v75, %v664
  %v666 = vlaneseq
  %v667 = vshrl.u32 %v666, 7
  %v668 = vsub.s32 6, %v667
  %v669 = vrot.slane %v76, %v668
  %v670 = vlaneseq
  %v671 = vshrl.u32 %v670, 7
  %v672 = vsub.s32 6, %v671
  %v673 = vrot.slane %v77, %v672
  %v674 = vlaneseq
  %v675 = vshrl.u32 %v674, 7
  %v676 = vsub.s32 6, %v675
  %v677 = vrot.slane %v78, %v676
  %v678 = vmul.f32 %v665, %v653
  %v679 = vmul.f32 %v669, %v654
  %v680 = vmul.f32 %v673, %v655
  %v681 = vmul.f32 %v677, %v661
  %v682 = vadd.f32 %v636, %v678
  %v683 = vadd.f32 %v637, %v679
  %v684 = vadd.f32 %v638, %v680
  %v685 = vadd.f32 %v639, %v681
  %690 = vrot.lane.b32.xlu0 %v318, 112
  %v691 = vpop.permute.xlu0 %690
  %692 = vrot.lane.b32.xlu0 %v320, 112
  %v693 = vpop.permute.xlu0 %692
  %694 = vrot.lane.b32.xlu0 %v399, 112
  %v695 = vpop.permute.xlu0 %694
  %696 = vrot.lane.b32.xlu0 %v401, 112
  %v697 = vpop.permute.xlu0 %696
  %vm698 = vcmask 916480
  %v699 = vsel %vm698, %v691, %v693
  %v700 = vsel %vm698, %v693, %v695
  %v701 = vsel %vm698, %v695, %v697
  %v707 = vsel %vm698, %v697, %v691
  %v708 = vlaneseq
  %v709 = vshrl.u32 %v708, 7
  %v710 = vsub.s32 7, %v709
  %v711 = vrot.slane %v75, %v710
  %v712 = vlaneseq
  %v713 = vshrl.u32 %v712, 7
  %v714 = vsub.s32 7, %v713
  %v715 = vrot.slane %v76, %v714
  %v716 = vlaneseq
  %v717 = vshrl.u32 %v716, 7
  %v718 = vsub.s32 7, %v717
  %v719 = vrot.slane %v77, %v718
  %v720 = vlaneseq
  %v721 = vshrl.u32 %v720, 7
  %v722 = vsub.s32 7, %v721
  %v723 = vrot.slane %v78, %v722
  %v724 = vmul.f32 %v711, %v699
  %v725 = vmul.f32 %v715, %v700
  %v726 = vmul.f32 %v719, %v701
  %v727 = vmul.f32 %v723, %v707
  %v728 = vadd.f32 %v682, %v724
  %v729 = vadd.f32 %v683, %v725
  %v730 = vadd.f32 %v684, %v726
  %v731 = vadd.f32 %v685, %v727
  %736 = vrot.lane.b32.xlu0 %v324, 111
  %v737 = vpop.permute.xlu0 %736
  %738 = vrot.lane.b32.xlu0 %v326, 111
  %v739 = vpop.permute.xlu0 %738
  %740 = vrot.lane.b32.xlu0 %v405, 111
  %v741 = vpop.permute.xlu0 %740
  %742 = vrot.lane.b32.xlu0 %v407, 111
  %v743 = vpop.permute.xlu0 %742
  %vm744 = vcmask 908288
  %v745 = vsel %vm744, %v737, %v739
  %v746 = vsel %vm744, %v739, %v741
  %v747 = vsel %vm744, %v741, %v743
  %v753 = vsel %vm744, %v743, %v737
  %v754 = vlaneseq
  %v755 = vshrl.u32 %v754, 7
  %v756 = vsub.s32 0, %v755
  %v757 = vrot.slane %v79, %v756
  %v758 = vlaneseq
  %v759 = vshrl.u32 %v758, 7
  %v760 = vsub.s32 0, %v759
  %v761 = vrot.slane %v80, %v760
  %v762 = vlaneseq
  %v763 = vshrl.u32 %v762, 7
  %v764 = vsub.s32 0, %v763
  %v765 = vrot.slane %v81, %v764
  %v766 = vlaneseq
  %v767 = vshrl.u32 %v766, 7
  %v768 = vsub.s32 0, %v767
  %v769 = vrot.slane %v82, %v768
  %v770 = vmul.f32 %v757, %v745
  %v771 = vmul.f32 %v761, %v746
  %v772 = vmul.f32 %v765, %v747
  %v773 = vmul.f32 %v769, %v753
  %v774 = vadd.f32 %v728, %v770
  %v775 = vadd.f32 %v729, %v771
  %v776 = vadd.f32 %v730, %v772
  %v777 = vadd.f32 %v731, %v773
  %v778 = vld [vmem:[%s6] sm:$0xff]
  %780 = vset.pattern.permute.xlu0 0
  %781 = vperm.xlu0 %780, %v778
  %v782 = vpop.permute.xlu0 %781
  %v784 = vadd.f32 %v774, %v782
  %v785 = vadd.f32 %v775, %v782
  %v786 = vadd.f32 %v776, %v782
  %v787 = vadd.f32 %v777, %v782
  %v788 = vmax.f32 %v784, 0.0
  %v789 = vmax.f32 %v785, 0.0
  %v790 = vmax.f32 %v786, 0.0
  %v791 = vmax.f32 %v787, 0.0
  %v792 = vld [vmem:[%s7] sm:$0xf]
  %v793 = vld [vmem:[%s7 + $0x4] sm:$0xf]
  %v794 = vpack.c.bf16 %v788, %v788
  %v795 = vpack.c.bf16 %v789, %v789
  %v796 = vpack.c.bf16 %v790, %v790
  %v797 = vpack.c.bf16 %v791, %v791
  %v798 = vld [vmem:[%s8] sm:$0xff]
  %v799 = vld [vmem:[%s8 + $0x8] sm:$0xff]
  %801 = vset.pattern.permute.xlu0 0
  %802 = vperm.xlu0 %801, %v798
  %v803 = vpop.permute.xlu0 %802
  %806 = vset.pattern.permute.xlu0 0
  %807 = vperm.xlu0 %806, %v799
  %v808 = vpop.permute.xlu0 %807
  %v812 = vunpack.c.l.b16 %v792
  %v813 = vunpack.c.l.b16 %v793
  %v814 = vpack.c.b16 %v813, %v812
  %vm815 = vcmask 64512
  %v817 = vsel %vm815, %v814, 0
  %vm819 = vcmask 1043456
  %v821 = vsel %vm819, %v794, 0
  %v824 = vsel %vm819, %v795, 0
  %v827 = vsel %vm819, %v796, 0
  %v830 = vsel %vm819, %v797, 0
  %832 = vmatprep.subr.bf16.mxu0 %v824
  %833 = vmatpush1.bf16.msra.mxu0 %v821
  %834 = vmatprep.subr.bf16.mxu0 0
  %835 = vmatpush1.bf16.msra.mxu0 0
  %836 = vmatprep.subr.bf16.mxu0 0
  %837 = vmatpush1.bf16.msra.mxu0 0
  %838 = vmatprep.subr.bf16.mxu0 0
  %839 = vmatpush1.bf16.msra.mxu0 0
  %840 = vmatprep.subr.bf16.mxu0 0
  %841 = vmatpush1.bf16.msra.mxu0 0
  %842 = vmatprep.subr.bf16.mxu0 0
  %843 = vmatpush1.bf16.msra.mxu0 0
  %844 = vmatprep.subr.bf16.mxu0 0
  %845 = vmatpush1.bf16.msra.mxu0 0
  %846 = vmatprep.subr.bf16.mxu0 0
  %847 = vmatpush1.bf16.msra.mxu0 0
  %848 = vmatprep.subr.bf16.mxu0 0
  %849 = vmatpush1.bf16.msra.mxu0 0
  %850 = vmatprep.subr.bf16.mxu0 0
  %851 = vmatpush1.bf16.msra.mxu0 0
  %852 = vmatprep.subr.bf16.mxu0 0
  %853 = vmatpush1.bf16.msra.mxu0 0
  %854 = vmatprep.subr.bf16.mxu0 0
  %855 = vmatpush1.bf16.msra.mxu0 0
  %856 = vmatprep.subr.bf16.mxu0 0
  %857 = vmatpush1.bf16.msra.mxu0 0
  %858 = vmatprep.subr.bf16.mxu0 0
  %859 = vmatpush1.bf16.msra.mxu0 0
  %860 = vmatprep.subr.bf16.mxu0 0
  %861 = vmatpush1.bf16.msra.mxu0 0
  %862 = vmatprep.subr.bf16.mxu0 0
  %863 = vmatpush1.bf16.msra.mxu0 0
  %864 = vmatprep.mubr.bf16.mxu0 0
  %865 = vmatmul.mubr.bf16.gmra.mrb[0].mxu0 %v817
  %v866 = vpop.f32.mrb[0].mxu0
  %v867 = vadd.f32 %v803, %v866
  %v868 = vpop.f32.mrb[0].mxu0
  %v869 = vadd.f32 %v803, %v868
  %v870 = vpop.f32.mrb[0].mxu0
  %v871 = vadd.f32 %v808, %v870
  %v872 = vpop.f32.mrb[0].mxu0
  %v873 = vadd.f32 %v808, %v872
  %874 = vdwg.mxu0
  %875 = vmatprep.subr.bf16.mxu0 %v830
  %876 = vmatpush1.bf16.msra.mxu0 %v827
  %877 = vmatprep.subr.bf16.mxu0 0
  %878 = vmatpush1.bf16.msra.mxu0 0
  %879 = vmatprep.subr.bf16.mxu0 0
  %880 = vmatpush1.bf16.msra.mxu0 0
  %881 = vmatprep.subr.bf16.mxu0 0
  %882 = vmatpush1.bf16.msra.mxu0 0
  %883 = vmatprep.subr.bf16.mxu0 0
  %884 = vmatpush1.bf16.msra.mxu0 0
  %885 = vmatprep.subr.bf16.mxu0 0
  %886 = vmatpush1.bf16.msra.mxu0 0
  %887 = vmatprep.subr.bf16.mxu0 0
  %888 = vmatpush1.bf16.msra.mxu0 0
  %889 = vmatprep.subr.bf16.mxu0 0
  %890 = vmatpush1.bf16.msra.mxu0 0
  %891 = vmatprep.subr.bf16.mxu0 0
  %892 = vmatpush1.bf16.msra.mxu0 0
  %893 = vmatprep.subr.bf16.mxu0 0
  %894 = vmatpush1.bf16.msra.mxu0 0
  %895 = vmatprep.subr.bf16.mxu0 0
  %896 = vmatpush1.bf16.msra.mxu0 0
  %897 = vmatprep.subr.bf16.mxu0 0
  %898 = vmatpush1.bf16.msra.mxu0 0
  %899 = vmatprep.subr.bf16.mxu0 0
  %900 = vmatpush1.bf16.msra.mxu0 0
  %901 = vmatprep.subr.bf16.mxu0 0
  %902 = vmatpush1.bf16.msra.mxu0 0
  %903 = vmatprep.subr.bf16.mxu0 0
  %904 = vmatpush1.bf16.msra.mxu0 0
  %905 = vmatprep.subr.bf16.mxu0 0
  %906 = vmatpush1.bf16.msra.mxu0 0
  %907 = vmatprep.mubr.bf16.mxu0 0
  %908 = vmatmul.mubr.bf16.gmra.mrb[0].mxu0 %v817
  %v909 = vpop.f32.mrb[0].mxu0
  %v910 = vadd.f32 %v803, %v909
  %v911 = vpop.f32.mrb[0].mxu0
  %v912 = vadd.f32 %v803, %v911
  %v913 = vpop.f32.mrb[0].mxu0
  %v914 = vadd.f32 %v808, %v913
  %v915 = vpop.f32.mrb[0].mxu0
  %v916 = vadd.f32 %v808, %v915
  %917 = vdwg.mxu0
  %v918 = vadd.f32 %v867, %v59
  %v919 = vadd.f32 %v869, %v60
  %v920 = vadd.f32 %v910, %v71
  %v921 = vadd.f32 %v912, %v72
  %v922 = vadd.f32 %v871, %v61
  %v923 = vadd.f32 %v873, %v62
  %v924 = vadd.f32 %v914, %v73
  %v925 = vadd.f32 %v916, %v74
  %s926 = scalar_lea.vmem %s3, 2
  %v927 = vld [vmem:[%s926] sm:$0x3]
  %v928 = vpack.c.bf16 %v922, %v918
  %v929 = vpack.c.bf16 %v923, %v919
  %v930 = vpack.c.bf16 %v924, %v920
  %v931 = vpack.c.bf16 %v925, %v921
  %s932 = scalar_lea.vmem %s4, 4
  %v933 = vld [vmem:[%s932] sm:$0xf]
  %935 = vset.pattern.permute.xlu0 0
  %936 = vperm.xlu0 %935, %v933
  %v937 = vpop.permute.xlu0 %936
  %v940 = vsel %vm94, %v927, 0
  %942 = vmatprep.subr.bf16.mxu0 %v929
  %943 = vmatpush1.bf16.msra.mxu0 %v928
  %944 = vmatprep.subr.bf16.mxu0 0
  %945 = vmatpush1.bf16.msra.mxu0 0
  %946 = vmatprep.subr.bf16.mxu0 0
  %947 = vmatpush1.bf16.msra.mxu0 0
  %948 = vmatprep.subr.bf16.mxu0 0
  %949 = vmatpush1.bf16.msra.mxu0 0
  %950 = vmatprep.subr.bf16.mxu0 0
  %951 = vmatpush1.bf16.msra.mxu0 0
  %952 = vmatprep.subr.bf16.mxu0 0
  %953 = vmatpush1.bf16.msra.mxu0 0
  %954 = vmatprep.subr.bf16.mxu0 0
  %955 = vmatpush1.bf16.msra.mxu0 0
  %956 = vmatprep.subr.bf16.mxu0 0
  %957 = vmatpush1.bf16.msra.mxu0 0
  %958 = vmatprep.subr.bf16.mxu0 0
  %959 = vmatpush1.bf16.msra.mxu0 0
  %960 = vmatprep.subr.bf16.mxu0 0
  %961 = vmatpush1.bf16.msra.mxu0 0
  %962 = vmatprep.subr.bf16.mxu0 0
  %963 = vmatpush1.bf16.msra.mxu0 0
  %964 = vmatprep.subr.bf16.mxu0 0
  %965 = vmatpush1.bf16.msra.mxu0 0
  %966 = vmatprep.subr.bf16.mxu0 0
  %967 = vmatpush1.bf16.msra.mxu0 0
  %968 = vmatprep.subr.bf16.mxu0 0
  %969 = vmatpush1.bf16.msra.mxu0 0
  %970 = vmatprep.subr.bf16.mxu0 0
  %971 = vmatpush1.bf16.msra.mxu0 0
  %972 = vmatprep.subr.bf16.mxu0 0
  %973 = vmatpush1.bf16.msra.mxu0 0
  %974 = vmatprep.mubr.bf16.mxu0 0
  %975 = vmatmul.mubr.bf16.gmra.mrb[0].mxu0 %v940
  %v976 = vpop.f32.mrb[0].mxu0
  %v977 = vadd.f32 %v937, %v976
  %v978 = vpop.f32.mrb[0].mxu0
  %v979 = vadd.f32 %v937, %v978
  %v980 = vpop.f32.mrb[0].mxu0
  %v981 = vpop.f32.mrb[0].mxu0
  %982 = vdwg.mxu0
  %983 = vmatprep.subr.bf16.mxu0 %v931
  %984 = vmatpush1.bf16.msra.mxu0 %v930
  %985 = vmatprep.subr.bf16.mxu0 0
  %986 = vmatpush1.bf16.msra.mxu0 0
  %987 = vmatprep.subr.bf16.mxu0 0
  %988 = vmatpush1.bf16.msra.mxu0 0
  %989 = vmatprep.subr.bf16.mxu0 0
  %990 = vmatpush1.bf16.msra.mxu0 0
  %991 = vmatprep.subr.bf16.mxu0 0
  %992 = vmatpush1.bf16.msra.mxu0 0
  %993 = vmatprep.subr.bf16.mxu0 0
  %994 = vmatpush1.bf16.msra.mxu0 0
  %995 = vmatprep.subr.bf16.mxu0 0
  %996 = vmatpush1.bf16.msra.mxu0 0
  %997 = vmatprep.subr.bf16.mxu0 0
  %998 = vmatpush1.bf16.msra.mxu0 0
  %999 = vmatprep.subr.bf16.mxu0 0
  %1000 = vmatpush1.bf16.msra.mxu0 0
  %1001 = vmatprep.subr.bf16.mxu0 0
  %1002 = vmatpush1.bf16.msra.mxu0 0
  %1003 = vmatprep.subr.bf16.mxu0 0
  %1004 = vmatpush1.bf16.msra.mxu0 0
  %1005 = vmatprep.subr.bf16.mxu0 0
  %1006 = vmatpush1.bf16.msra.mxu0 0
  %1007 = vmatprep.subr.bf16.mxu0 0
  %1008 = vmatpush1.bf16.msra.mxu0 0
  %1009 = vmatprep.subr.bf16.mxu0 0
  %1010 = vmatpush1.bf16.msra.mxu0 0
  %1011 = vmatprep.subr.bf16.mxu0 0
  %1012 = vmatpush1.bf16.msra.mxu0 0
  %1013 = vmatprep.subr.bf16.mxu0 0
  %1014 = vmatpush1.bf16.msra.mxu0 0
  %1015 = vmatprep.mubr.bf16.mxu0 0
  %1016 = vmatmul.mubr.bf16.gmra.mrb[0].mxu0 %v940
  %v1017 = vpop.f32.mrb[0].mxu0
  %v1018 = vadd.f32 %v937, %v1017
  %v1019 = vpop.f32.mrb[0].mxu0
  %v1020 = vadd.f32 %v937, %v1019
  %v1021 = vpop.f32.mrb[0].mxu0
  %v1022 = vpop.f32.mrb[0].mxu0
  %1023 = vdwg.mxu0
  %v1024 = vmax.f32 %v977, 0.0
  %v1025 = vmax.f32 %v979, 0.0
  %v1026 = vmax.f32 %v1018, 0.0
  %v1027 = vmax.f32 %v1020, 0.0
  %v1028 = vpack.c.bf16 %v1024, %v1024
  %v1029 = vpack.c.bf16 %v1025, %v1025
  %v1030 = vpack.c.bf16 %v1026, %v1026
  %v1031 = vpack.c.bf16 %v1027, %v1027
  %s1032 = scalar_lea.vmem %s5, 36
  %v1033 = vld [vmem:[%s1032] sm:$0xf]
  %v1034 = vld [vmem:[%s1032 + $0x4] sm:$0xf]
  %v1035 = vld [vmem:[%s1032 + $0x8] sm:$0xf]
  %v1036 = vld [vmem:[%s1032 + $0xc] sm:$0xf]
  %v1037 = vld [vmem:[%s1032 + $0x10] sm:$0xf]
  %v1038 = vld [vmem:[%s1032 + $0x14] sm:$0xf]
  %v1039 = vld [vmem:[%s1032 + $0x18] sm:$0xf]
  %v1040 = vld [vmem:[%s1032 + $0x1c] sm:$0xf]
  %v1041 = vld [vmem:[%s1032 + $0x20] sm:$0xf]
  %v1051 = vunpack.c.l.b16 %v1033
  %v1052 = vunpack.c.l.b16 %v1034
  %v1053 = vunpack.c.l.b16 %v1035
  %v1054 = vunpack.c.l.b16 %v1036
  %v1055 = vunpack.c.l.b16 %v1037
  %v1056 = vunpack.c.l.b16 %v1038
  %v1057 = vunpack.c.l.b16 %v1039
  %v1058 = vunpack.c.l.b16 %v1040
  %v1059 = vunpack.c.l.b16 %v1041
  %v1060 = vpack.c.b16 %v1052, %v1051
  %v1061 = vpack.c.b16 %v1054, %v1053
  %v1062 = vpack.c.b16 %v1056, %v1055
  %v1063 = vpack.c.b16 %v1058, %v1057
  %v1064 = vpack.c.b16 %v1059, %v1059
  %v1066 = vsel %vm220, %v1060, 0
  %v1069 = vsel %vm220, %v1061, 0
  %v1072 = vsel %vm220, %v1062, 0
  %v1075 = vsel %vm220, %v1063, 0
  %v1078 = vsel %vm220, %v1064, 0
  %v1081 = vsel %vm236, %v1028, 0
  %v1084 = vsel %vm236, %v1029, 0
  %v1087 = vsel %vm236, %v1030, 0
  %v1090 = vsel %vm236, %v1031, 0
  %1092 = vmatprep.subr.bf16.mxu0 %v1084
  %1093 = vmatpush1.bf16.msra.mxu0 %v1081
  %1094 = vmatprep.subr.bf16.mxu0 0
  %1095 = vmatpush1.bf16.msra.mxu0 0
  %1096 = vmatprep.subr.bf16.mxu0 0
  %1097 = vmatpush1.bf16.msra.mxu0 0
  %1098 = vmatprep.subr.bf16.mxu0 0
  %1099 = vmatpush1.bf16.msra.mxu0 0
  %1100 = vmatprep.subr.bf16.mxu0 0
  %1101 = vmatpush1.bf16.msra.mxu0 0
  %1102 = vmatprep.subr.bf16.mxu0 0
  %1103 = vmatpush1.bf16.msra.mxu0 0
  %1104 = vmatprep.subr.bf16.mxu0 0
  %1105 = vmatpush1.bf16.msra.mxu0 0
  %1106 = vmatprep.subr.bf16.mxu0 0
  %1107 = vmatpush1.bf16.msra.mxu0 0
  %1108 = vmatprep.subr.bf16.mxu0 0
  %1109 = vmatpush1.bf16.msra.mxu0 0
  %1110 = vmatprep.subr.bf16.mxu0 0
  %1111 = vmatpush1.bf16.msra.mxu0 0
  %1112 = vmatprep.subr.bf16.mxu0 0
  %1113 = vmatpush1.bf16.msra.mxu0 0
  %1114 = vmatprep.subr.bf16.mxu0 0
  %1115 = vmatpush1.bf16.msra.mxu0 0
  %1116 = vmatprep.subr.bf16.mxu0 0
  %1117 = vmatpush1.bf16.msra.mxu0 0
  %1118 = vmatprep.subr.bf16.mxu0 0
  %1119 = vmatpush1.bf16.msra.mxu0 0
  %1120 = vmatprep.subr.bf16.mxu0 0
  %1121 = vmatpush1.bf16.msra.mxu0 0
  %1122 = vmatprep.subr.bf16.mxu0 0
  %1123 = vmatpush1.bf16.msra.mxu0 0
  %1124 = vmatprep.mubr.bf16.mxu0 0
  %1125 = vmatmul.mubr.bf16.gmra.mrb[0].mxu0 %v1066
  %v1126 = vpop.f32.mrb[0].mxu0
  %v1127 = vadd.f32 0.0, %v1126
  %v1128 = vpop.f32.mrb[0].mxu0
  %v1129 = vadd.f32 0.0, %v1128
  %v1130 = vpop.f32.mrb[0].mxu0
  %v1131 = vadd.f32 0.0, %v1130
  %v1132 = vpop.f32.mrb[0].mxu0
  %v1133 = vadd.f32 0.0, %v1132
  %1134 = vmatprep.mubr.bf16.mxu0 0
  %1135 = vmatmul.mubr.bf16.gmra.mrb[0].mxu0 %v1069
  %v1136 = vpop.f32.mrb[0].mxu0
  %v1137 = vadd.f32 0.0, %v1136
  %v1138 = vpop.f32.mrb[0].mxu0
  %v1139 = vadd.f32 0.0, %v1138
  %v1140 = vpop.f32.mrb[0].mxu0
  %v1141 = vadd.f32 0.0, %v1140
  %v1142 = vpop.f32.mrb[0].mxu0
  %v1143 = vadd.f32 0.0, %v1142
  %1144 = vmatprep.mubr.bf16.mxu0 0
  %1145 = vmatmul.mubr.bf16.gmra.mrb[0].mxu0 %v1072
  %v1146 = vpop.f32.mrb[0].mxu0
  %v1147 = vadd.f32 0.0, %v1146
  %v1148 = vpop.f32.mrb[0].mxu0
  %v1149 = vadd.f32 0.0, %v1148
  %v1150 = vpop.f32.mrb[0].mxu0
  %v1151 = vadd.f32 0.0, %v1150
  %v1152 = vpop.f32.mrb[0].mxu0
  %v1153 = vadd.f32 0.0, %v1152
  %1154 = vmatprep.mubr.bf16.mxu0 0
  %1155 = vmatmul.mubr.bf16.gmra.mrb[0].mxu0 %v1075
  %v1156 = vpop.f32.mrb[0].mxu0
  %v1157 = vadd.f32 0.0, %v1156
  %v1158 = vpop.f32.mrb[0].mxu0
  %v1159 = vadd.f32 0.0, %v1158
  %v1160 = vpop.f32.mrb[0].mxu0
  %v1161 = vadd.f32 0.0, %v1160
  %v1162 = vpop.f32.mrb[0].mxu0
  %v1163 = vadd.f32 0.0, %v1162
  %1164 = vmatprep.mubr.bf16.mxu0 0
  %1165 = vmatmul.mubr.bf16.gmra.mrb[0].mxu0 %v1078
  %v1166 = vpop.f32.mrb[0].mxu0
  %v1167 = vadd.f32 0.0, %v1166
  %v1168 = vpop.f32.mrb[0].mxu0
  %v1169 = vadd.f32 0.0, %v1168
  %v1170 = vpop.f32.mrb[0].mxu0
  %v1171 = vpop.f32.mrb[0].mxu0
  %1172 = vdwg.mxu0
  %1173 = vmatprep.subr.bf16.mxu0 %v1090
  %1174 = vmatpush1.bf16.msra.mxu0 %v1087
  %1175 = vmatprep.subr.bf16.mxu0 0
  %1176 = vmatpush1.bf16.msra.mxu0 0
  %1177 = vmatprep.subr.bf16.mxu0 0
  %1178 = vmatpush1.bf16.msra.mxu0 0
  %1179 = vmatprep.subr.bf16.mxu0 0
  %1180 = vmatpush1.bf16.msra.mxu0 0
  %1181 = vmatprep.subr.bf16.mxu0 0
  %1182 = vmatpush1.bf16.msra.mxu0 0
  %1183 = vmatprep.subr.bf16.mxu0 0
  %1184 = vmatpush1.bf16.msra.mxu0 0
  %1185 = vmatprep.subr.bf16.mxu0 0
  %1186 = vmatpush1.bf16.msra.mxu0 0
  %1187 = vmatprep.subr.bf16.mxu0 0
  %1188 = vmatpush1.bf16.msra.mxu0 0
  %1189 = vmatprep.subr.bf16.mxu0 0
  %1190 = vmatpush1.bf16.msra.mxu0 0
  %1191 = vmatprep.subr.bf16.mxu0 0
  %1192 = vmatpush1.bf16.msra.mxu0 0
  %1193 = vmatprep.subr.bf16.mxu0 0
  %1194 = vmatpush1.bf16.msra.mxu0 0
  %1195 = vmatprep.subr.bf16.mxu0 0
  %1196 = vmatpush1.bf16.msra.mxu0 0
  %1197 = vmatprep.subr.bf16.mxu0 0
  %1198 = vmatpush1.bf16.msra.mxu0 0
  %1199 = vmatprep.subr.bf16.mxu0 0
  %1200 = vmatpush1.bf16.msra.mxu0 0
  %1201 = vmatprep.subr.bf16.mxu0 0
  %1202 = vmatpush1.bf16.msra.mxu0 0
  %1203 = vmatprep.subr.bf16.mxu0 0
  %1204 = vmatpush1.bf16.msra.mxu0 0
  %1205 = vmatprep.mubr.bf16.mxu0 0
  %1206 = vmatmul.mubr.bf16.gmra.mrb[0].mxu0 %v1066
  %v1207 = vpop.f32.mrb[0].mxu0
  %v1208 = vadd.f32 0.0, %v1207
  %v1209 = vpop.f32.mrb[0].mxu0
  %v1210 = vadd.f32 0.0, %v1209
  %v1211 = vpop.f32.mrb[0].mxu0
  %v1212 = vadd.f32 0.0, %v1211
  %v1213 = vpop.f32.mrb[0].mxu0
  %v1214 = vadd.f32 0.0, %v1213
  %1215 = vmatprep.mubr.bf16.mxu0 0
  %1216 = vmatmul.mubr.bf16.gmra.mrb[0].mxu0 %v1069
  %v1217 = vpop.f32.mrb[0].mxu0
  %v1218 = vadd.f32 0.0, %v1217
  %v1219 = vpop.f32.mrb[0].mxu0
  %v1220 = vadd.f32 0.0, %v1219
  %v1221 = vpop.f32.mrb[0].mxu0
  %v1222 = vadd.f32 0.0, %v1221
  %v1223 = vpop.f32.mrb[0].mxu0
  %v1224 = vadd.f32 0.0, %v1223
  %1225 = vmatprep.mubr.bf16.mxu0 0
  %1226 = vmatmul.mubr.bf16.gmra.mrb[0].mxu0 %v1072
  %v1227 = vpop.f32.mrb[0].mxu0
  %v1228 = vadd.f32 0.0, %v1227
  %v1229 = vpop.f32.mrb[0].mxu0
  %v1230 = vadd.f32 0.0, %v1229
  %v1231 = vpop.f32.mrb[0].mxu0
  %v1232 = vadd.f32 0.0, %v1231
  %v1233 = vpop.f32.mrb[0].mxu0
  %v1234 = vadd.f32 0.0, %v1233
  %1235 = vmatprep.mubr.bf16.mxu0 0
  %1236 = vmatmul.mubr.bf16.gmra.mrb[0].mxu0 %v1075
  %v1237 = vpop.f32.mrb[0].mxu0
  %v1238 = vadd.f32 0.0, %v1237
  %v1239 = vpop.f32.mrb[0].mxu0
  %v1240 = vadd.f32 0.0, %v1239
  %v1241 = vpop.f32.mrb[0].mxu0
  %v1242 = vadd.f32 0.0, %v1241
  %v1243 = vpop.f32.mrb[0].mxu0
  %v1244 = vadd.f32 0.0, %v1243
  %1245 = vmatprep.mubr.bf16.mxu0 0
  %1246 = vmatmul.mubr.bf16.gmra.mrb[0].mxu0 %v1078
  %v1247 = vpop.f32.mrb[0].mxu0
  %v1248 = vadd.f32 0.0, %v1247
  %v1249 = vpop.f32.mrb[0].mxu0
  %v1250 = vadd.f32 0.0, %v1249
  %v1251 = vpop.f32.mrb[0].mxu0
  %v1252 = vpop.f32.mrb[0].mxu0
  %1253 = vdwg.mxu0
  %1255 = vrot.lane.b32.xlu0 %v1210, 17
  %v1256 = vpop.permute.xlu0 %1255
  %1261 = vrot.lane.b32.xlu0 %v1127, 17
  %v1262 = vpop.permute.xlu0 %1261
  %1263 = vrot.lane.b32.xlu0 %v1129, 17
  %v1264 = vpop.permute.xlu0 %1263
  %1265 = vrot.lane.b32.xlu0 %v1208, 17
  %v1266 = vpop.permute.xlu0 %1265
  %v1267 = vsel %vm424, %v1262, %v1264
  %v1268 = vsel %vm424, %v1264, %v1266
  %v1269 = vsel %vm424, %v1266, %v1256
  %v1274 = vsel %vm424, %v1256, %v1262
  %v1275 = vmul.f32 %v436, %v1274
  %v1276 = vmul.f32 %v440, %v1267
  %v1277 = vmul.f32 %v444, %v1268
  %v1278 = vmul.f32 %v448, %v1269
  %v1279 = vadd.f32 %v1147, %v1275
  %v1280 = vadd.f32 %v1149, %v1276
  %v1281 = vadd.f32 %v1228, %v1277
  %v1282 = vadd.f32 %v1230, %v1278
  %1284 = vrot.lane.b32.xlu0 %v1214, 16
  %v1285 = vpop.permute.xlu0 %1284
  %1290 = vrot.lane.b32.xlu0 %v1131, 16
  %v1291 = vpop.permute.xlu0 %1290
  %1292 = vrot.lane.b32.xlu0 %v1133, 16
  %v1293 = vpop.permute.xlu0 %1292
  %1294 = vrot.lane.b32.xlu0 %v1212, 16
  %v1295 = vpop.permute.xlu0 %1294
  %v1296 = vsel %vm94, %v1291, %v1293
  %v1297 = vsel %vm94, %v1293, %v1295
  %v1298 = vsel %vm94, %v1295, %v1285
  %v1303 = vsel %vm94, %v1285, %v1291
  %v1304 = vmul.f32 %v481, %v1303
  %v1305 = vmul.f32 %v485, %v1296
  %v1306 = vmul.f32 %v489, %v1297
  %v1307 = vmul.f32 %v493, %v1298
  %v1308 = vadd.f32 %v1279, %v1304
  %v1309 = vadd.f32 %v1280, %v1305
  %v1310 = vadd.f32 %v1281, %v1306
  %v1311 = vadd.f32 %v1282, %v1307
  %1313 = vrot.lane.b32.xlu0 %v1220, 15
  %v1314 = vpop.permute.xlu0 %1313
  %1319 = vrot.lane.b32.xlu0 %v1137, 15
  %v1320 = vpop.permute.xlu0 %1319
  %1321 = vrot.lane.b32.xlu0 %v1139, 15
  %v1322 = vpop.permute.xlu0 %1321
  %1323 = vrot.lane.b32.xlu0 %v1218, 15
  %v1324 = vpop.permute.xlu0 %1323
  %v1325 = vsel %vm515, %v1320, %v1322
  %v1326 = vsel %vm515, %v1322, %v1324
  %v1327 = vsel %vm515, %v1324, %v1314
  %v1332 = vsel %vm515, %v1314, %v1320
  %v1333 = vmul.f32 %v527, %v1332
  %v1334 = vmul.f32 %v531, %v1325
  %v1335 = vmul.f32 %v535, %v1326
  %v1336 = vmul.f32 %v539, %v1327
  %v1337 = vadd.f32 %v1308, %v1333
  %v1338 = vadd.f32 %v1309, %v1334
  %v1339 = vadd.f32 %v1310, %v1335
  %v1340 = vadd.f32 %v1311, %v1336
  %1342 = vrot.lane.b32.xlu0 %v1224, 1
  %v1343 = vpop.permute.xlu0 %1342
  %1348 = vrot.lane.b32.xlu0 %v1141, 1
  %v1349 = vpop.permute.xlu0 %1348
  %1350 = vrot.lane.b32.xlu0 %v1143, 1
  %v1351 = vpop.permute.xlu0 %1350
  %1352 = vrot.lane.b32.xlu0 %v1222, 1
  %v1353 = vpop.permute.xlu0 %1352
  %v1354 = vsel %vm561, %v1349, %v1351
  %v1355 = vsel %vm561, %v1351, %v1353
  %v1356 = vsel %vm561, %v1353, %v1343
  %v1361 = vsel %vm561, %v1343, %v1349
  %v1362 = vmul.f32 %v573, %v1361
  %v1363 = vmul.f32 %v577, %v1354
  %v1364 = vmul.f32 %v581, %v1355
  %v1365 = vmul.f32 %v585, %v1356
  %v1366 = vadd.f32 %v1337, %v1362
  %v1367 = vadd.f32 %v1338, %v1363
  %v1368 = vadd.f32 %v1339, %v1364
  %v1369 = vadd.f32 %v1340, %v1365
  %1374 = vrot.lane.b32.xlu0 %v1151, 127
  %v1375 = vpop.permute.xlu0 %1374
  %1376 = vrot.lane.b32.xlu0 %v1153, 127
  %v1377 = vpop.permute.xlu0 %1376
  %1378 = vrot.lane.b32.xlu0 %v1232, 127
  %v1379 = vpop.permute.xlu0 %1378
  %1380 = vrot.lane.b32.xlu0 %v1234, 127
  %v1381 = vpop.permute.xlu0 %1380
  %v1382 = vsel %vm606, %v1375, %v1377
  %v1383 = vsel %vm606, %v1377, %v1379
  %v1384 = vsel %vm606, %v1379, %v1381
  %v1390 = vsel %vm606, %v1381, %v1375
  %v1391 = vmul.f32 %v619, %v1382
  %v1392 = vmul.f32 %v623, %v1383
  %v1393 = vmul.f32 %v627, %v1384
  %v1394 = vmul.f32 %v631, %v1390
  %v1395 = vadd.f32 %v1366, %v1391
  %v1396 = vadd.f32 %v1367, %v1392
  %v1397 = vadd.f32 %v1368, %v1393
  %v1398 = vadd.f32 %v1369, %v1394
  %1403 = vrot.lane.b32.xlu0 %v1157, 113
  %v1404 = vpop.permute.xlu0 %1403
  %1405 = vrot.lane.b32.xlu0 %v1159, 113
  %v1406 = vpop.permute.xlu0 %1405
  %1407 = vrot.lane.b32.xlu0 %v1238, 113
  %v1408 = vpop.permute.xlu0 %1407
  %1409 = vrot.lane.b32.xlu0 %v1240, 113
  %v1410 = vpop.permute.xlu0 %1409
  %v1411 = vsel %vm652, %v1404, %v1406
  %v1412 = vsel %vm652, %v1406, %v1408
  %v1413 = vsel %vm652, %v1408, %v1410
  %v1419 = vsel %vm652, %v1410, %v1404
  %v1420 = vmul.f32 %v665, %v1411
  %v1421 = vmul.f32 %v669, %v1412
  %v1422 = vmul.f32 %v673, %v1413
  %v1423 = vmul.f32 %v677, %v1419
  %v1424 = vadd.f32 %v1395, %v1420
  %v1425 = vadd.f32 %v1396, %v1421
  %v1426 = vadd.f32 %v1397, %v1422
  %v1427 = vadd.f32 %v1398, %v1423
  %1432 = vrot.lane.b32.xlu0 %v1161, 112
  %v1433 = vpop.permute.xlu0 %1432
  %1434 = vrot.lane.b32.xlu0 %v1163, 112
  %v1435 = vpop.permute.xlu0 %1434
  %1436 = vrot.lane.b32.xlu0 %v1242, 112
  %v1437 = vpop.permute.xlu0 %1436
  %1438 = vrot.lane.b32.xlu0 %v1244, 112
  %v1439 = vpop.permute.xlu0 %1438
  %v1440 = vsel %vm698, %v1433, %v1435
  %v1441 = vsel %vm698, %v1435, %v1437
  %v1442 = vsel %vm698, %v1437, %v1439
  %v1448 = vsel %vm698, %v1439, %v1433
  %v1449 = vmul.f32 %v711, %v1440
  %v1450 = vmul.f32 %v715, %v1441
  %v1451 = vmul.f32 %v719, %v1442
  %v1452 = vmul.f32 %v723, %v1448
  %v1453 = vadd.f32 %v1424, %v1449
  %v1454 = vadd.f32 %v1425, %v1450
  %v1455 = vadd.f32 %v1426, %v1451
  %v1456 = vadd.f32 %v1427, %v1452
  %1461 = vrot.lane.b32.xlu0 %v1167, 111
  %v1462 = vpop.permute.xlu0 %1461
  %1463 = vrot.lane.b32.xlu0 %v1169, 111
  %v1464 = vpop.permute.xlu0 %1463
  %1465 = vrot.lane.b32.xlu0 %v1248, 111
  %v1466 = vpop.permute.xlu0 %1465
  %1467 = vrot.lane.b32.xlu0 %v1250, 111
  %v1468 = vpop.permute.xlu0 %1467
  %v1469 = vsel %vm744, %v1462, %v1464
  %v1470 = vsel %vm744, %v1464, %v1466
  %v1471 = vsel %vm744, %v1466, %v1468
  %v1477 = vsel %vm744, %v1468, %v1462
  %v1478 = vmul.f32 %v757, %v1469
  %v1479 = vmul.f32 %v761, %v1470
  %v1480 = vmul.f32 %v765, %v1471
  %v1481 = vmul.f32 %v769, %v1477
  %v1482 = vadd.f32 %v1453, %v1478
  %v1483 = vadd.f32 %v1454, %v1479
  %v1484 = vadd.f32 %v1455, %v1480
  %v1485 = vadd.f32 %v1456, %v1481
  %s1486 = scalar_lea.vmem %s6, 8
  %v1487 = vld [vmem:[%s1486] sm:$0xff]
  %1489 = vset.pattern.permute.xlu0 0
  %1490 = vperm.xlu0 %1489, %v1487
  %v1491 = vpop.permute.xlu0 %1490
  %v1493 = vadd.f32 %v1482, %v1491
  %v1494 = vadd.f32 %v1483, %v1491
  %v1495 = vadd.f32 %v1484, %v1491
  %v1496 = vadd.f32 %v1485, %v1491
  %v1497 = vmax.f32 %v1493, 0.0
  %v1498 = vmax.f32 %v1494, 0.0
  %v1499 = vmax.f32 %v1495, 0.0
  %v1500 = vmax.f32 %v1496, 0.0
  %s1501 = scalar_lea.vmem %s7, 8
  %v1502 = vld [vmem:[%s1501] sm:$0xf]
  %v1503 = vld [vmem:[%s1501 + $0x4] sm:$0xf]
  %v1504 = vpack.c.bf16 %v1497, %v1497
  %v1505 = vpack.c.bf16 %v1498, %v1498
  %v1506 = vpack.c.bf16 %v1499, %v1499
  %v1507 = vpack.c.bf16 %v1500, %v1500
  %s1508 = scalar_lea.vmem %s8, 16
  %v1509 = vld [vmem:[%s1508] sm:$0xff]
  %v1510 = vld [vmem:[%s1508 + $0x8] sm:$0xff]
  %1512 = vset.pattern.permute.xlu0 0
  %1513 = vperm.xlu0 %1512, %v1509
  %v1514 = vpop.permute.xlu0 %1513
  %1517 = vset.pattern.permute.xlu0 0
  %1518 = vperm.xlu0 %1517, %v1510
  %v1519 = vpop.permute.xlu0 %1518
  %v1523 = vunpack.c.l.b16 %v1502
  %v1524 = vunpack.c.l.b16 %v1503
  %v1525 = vpack.c.b16 %v1524, %v1523
  %v1527 = vsel %vm815, %v1525, 0
  %v1530 = vsel %vm819, %v1504, 0
  %v1533 = vsel %vm819, %v1505, 0
  %v1536 = vsel %vm819, %v1506, 0
  %v1539 = vsel %vm819, %v1507, 0
  %1541 = vmatprep.subr.bf16.mxu0 %v1533
  %1542 = vmatpush1.bf16.msra.mxu0 %v1530
  %1543 = vmatprep.subr.bf16.mxu0 0
  %1544 = vmatpush1.bf16.msra.mxu0 0
  %1545 = vmatprep.subr.bf16.mxu0 0
  %1546 = vmatpush1.bf16.msra.mxu0 0
  %1547 = vmatprep.subr.bf16.mxu0 0
  %1548 = vmatpush1.bf16.msra.mxu0 0
  %1549 = vmatprep.subr.bf16.mxu0 0
  %1550 = vmatpush1.bf16.msra.mxu0 0
  %1551 = vmatprep.subr.bf16.mxu0 0
  %1552 = vmatpush1.bf16.msra.mxu0 0
  %1553 = vmatprep.subr.bf16.mxu0 0
  %1554 = vmatpush1.bf16.msra.mxu0 0
  %1555 = vmatprep.subr.bf16.mxu0 0
  %1556 = vmatpush1.bf16.msra.mxu0 0
  %1557 = vmatprep.subr.bf16.mxu0 0
  %1558 = vmatpush1.bf16.msra.mxu0 0
  %1559 = vmatprep.subr.bf16.mxu0 0
  %1560 = vmatpush1.bf16.msra.mxu0 0
  %1561 = vmatprep.subr.bf16.mxu0 0
  %1562 = vmatpush1.bf16.msra.mxu0 0
  %1563 = vmatprep.subr.bf16.mxu0 0
  %1564 = vmatpush1.bf16.msra.mxu0 0
  %1565 = vmatprep.subr.bf16.mxu0 0
  %1566 = vmatpush1.bf16.msra.mxu0 0
  %1567 = vmatprep.subr.bf16.mxu0 0
  %1568 = vmatpush1.bf16.msra.mxu0 0
  %1569 = vmatprep.subr.bf16.mxu0 0
  %1570 = vmatpush1.bf16.msra.mxu0 0
  %1571 = vmatprep.subr.bf16.mxu0 0
  %1572 = vmatpush1.bf16.msra.mxu0 0
  %1573 = vmatprep.mubr.bf16.mxu0 0
  %1574 = vmatmul.mubr.bf16.gmra.mrb[0].mxu0 %v1527
  %v1575 = vpop.f32.mrb[0].mxu0
  %v1576 = vadd.f32 %v1514, %v1575
  %v1577 = vpop.f32.mrb[0].mxu0
  %v1578 = vadd.f32 %v1514, %v1577
  %v1579 = vpop.f32.mrb[0].mxu0
  %v1580 = vadd.f32 %v1519, %v1579
  %v1581 = vpop.f32.mrb[0].mxu0
  %v1582 = vadd.f32 %v1519, %v1581
  %1583 = vdwg.mxu0
  %1584 = vmatprep.subr.bf16.mxu0 %v1539
  %1585 = vmatpush1.bf16.msra.mxu0 %v1536
  %1586 = vmatprep.subr.bf16.mxu0 0
  %1587 = vmatpush1.bf16.msra.mxu0 0
  %1588 = vmatprep.subr.bf16.mxu0 0
  %1589 = vmatpush1.bf16.msra.mxu0 0
  %1590 = vmatprep.subr.bf16.mxu0 0
  %1591 = vmatpush1.bf16.msra.mxu0 0
  %1592 = vmatprep.subr.bf16.mxu0 0
  %1593 = vmatpush1.bf16.msra.mxu0 0
  %1594 = vmatprep.subr.bf16.mxu0 0
  %1595 = vmatpush1.bf16.msra.mxu0 0
  %1596 = vmatprep.subr.bf16.mxu0 0
  %1597 = vmatpush1.bf16.msra.mxu0 0
  %1598 = vmatprep.subr.bf16.mxu0 0
  %1599 = vmatpush1.bf16.msra.mxu0 0
  %1600 = vmatprep.subr.bf16.mxu0 0
  %1601 = vmatpush1.bf16.msra.mxu0 0
  %1602 = vmatprep.subr.bf16.mxu0 0
  %1603 = vmatpush1.bf16.msra.mxu0 0
  %1604 = vmatprep.subr.bf16.mxu0 0
  %1605 = vmatpush1.bf16.msra.mxu0 0
  %1606 = vmatprep.subr.bf16.mxu0 0
  %1607 = vmatpush1.bf16.msra.mxu0 0
  %1608 = vmatprep.subr.bf16.mxu0 0
  %1609 = vmatpush1.bf16.msra.mxu0 0
  %1610 = vmatprep.subr.bf16.mxu0 0
  %1611 = vmatpush1.bf16.msra.mxu0 0
  %1612 = vmatprep.subr.bf16.mxu0 0
  %1613 = vmatpush1.bf16.msra.mxu0 0
  %1614 = vmatprep.subr.bf16.mxu0 0
  %1615 = vmatpush1.bf16.msra.mxu0 0
  %1616 = vmatprep.mubr.bf16.mxu0 0
  %1617 = vmatmul.mubr.bf16.gmra.mrb[0].mxu0 %v1527
  %v1618 = vpop.f32.mrb[0].mxu0
  %v1619 = vadd.f32 %v1514, %v1618
  %v1620 = vpop.f32.mrb[0].mxu0
  %v1621 = vadd.f32 %v1514, %v1620
  %v1622 = vpop.f32.mrb[0].mxu0
  %v1623 = vadd.f32 %v1519, %v1622
  %v1624 = vpop.f32.mrb[0].mxu0
  %v1625 = vadd.f32 %v1519, %v1624
  %1626 = vdwg.mxu0
  %v1627 = vadd.f32 %v1576, %v918
  %v1628 = vadd.f32 %v1578, %v919
  %v1629 = vadd.f32 %v1619, %v920
  %v1630 = vadd.f32 %v1621, %v921
  %v1631 = vadd.f32 %v1580, %v922
  %v1632 = vadd.f32 %v1582, %v923
  %v1633 = vadd.f32 %v1623, %v924
  %v1634 = vadd.f32 %v1625, %v925
  %v1635 = vld [vmem:[%s9] sm:$0xf]
  %v1636 = vld [vmem:[%s9 + $0x4] sm:$0xf]
  %v1637 = vpack.c.bf16 %v1631, %v1627
  %v1638 = vpack.c.bf16 %v1632, %v1628
  %v1639 = vpack.c.bf16 %v1633, %v1629
  %v1640 = vpack.c.bf16 %v1634, %v1630
  %v1641 = vld [vmem:[%s10] sm:$0xff]
  %v1642 = vld [vmem:[%s10 + $0x8] sm:$0xff]
  %1644 = vset.pattern.permute.xlu0 0
  %1645 = vperm.xlu0 %1644, %v1641
  %v1646 = vpop.permute.xlu0 %1645
  %1649 = vset.pattern.permute.xlu0 0
  %1650 = vperm.xlu0 %1649, %v1642
  %v1651 = vpop.permute.xlu0 %1650
  %v1655 = vunpack.c.l.b16 %v1635
  %v1656 = vunpack.c.l.b16 %v1636
  %v1657 = vpack.c.b16 %v1656, %v1655
  %v1659 = vsel %vm94, %v1657, 0
  %1661 = vmatprep.subr.bf16.mxu0 %v1638
  %1662 = vmatpush1.bf16.msra.mxu0 %v1637
  %1663 = vmatprep.subr.bf16.mxu0 0
  %1664 = vmatpush1.bf16.msra.mxu0 0
  %1665 = vmatprep.subr.bf16.mxu0 0
  %1666 = vmatpush1.bf16.msra.mxu0 0
  %1667 = vmatprep.subr.bf16.mxu0 0
  %1668 = vmatpush1.bf16.msra.mxu0 0
  %1669 = vmatprep.subr.bf16.mxu0 0
  %1670 = vmatpush1.bf16.msra.mxu0 0
  %1671 = vmatprep.subr.bf16.mxu0 0
  %1672 = vmatpush1.bf16.msra.mxu0 0
  %1673 = vmatprep.subr.bf16.mxu0 0
  %1674 = vmatpush1.bf16.msra.mxu0 0
  %1675 = vmatprep.subr.bf16.mxu0 0
  %1676 = vmatpush1.bf16.msra.mxu0 0
  %1677 = vmatprep.subr.bf16.mxu0 0
  %1678 = vmatpush1.bf16.msra.mxu0 0
  %1679 = vmatprep.subr.bf16.mxu0 0
  %1680 = vmatpush1.bf16.msra.mxu0 0
  %1681 = vmatprep.subr.bf16.mxu0 0
  %1682 = vmatpush1.bf16.msra.mxu0 0
  %1683 = vmatprep.subr.bf16.mxu0 0
  %1684 = vmatpush1.bf16.msra.mxu0 0
  %1685 = vmatprep.subr.bf16.mxu0 0
  %1686 = vmatpush1.bf16.msra.mxu0 0
  %1687 = vmatprep.subr.bf16.mxu0 0
  %1688 = vmatpush1.bf16.msra.mxu0 0
  %1689 = vmatprep.subr.bf16.mxu0 0
  %1690 = vmatpush1.bf16.msra.mxu0 0
  %1691 = vmatprep.subr.bf16.mxu0 0
  %1692 = vmatpush1.bf16.msra.mxu0 0
  %1693 = vmatprep.mubr.bf16.mxu0 0
  %1694 = vmatmul.mubr.bf16.gmra.mrb[0].mxu0 %v1659
  %v1695 = vpop.f32.mrb[0].mxu0
  %v1696 = vadd.f32 %v1646, %v1695
  %v1697 = vpop.f32.mrb[0].mxu0
  %v1698 = vadd.f32 %v1646, %v1697
  %v1699 = vpop.f32.mrb[0].mxu0
  %v1700 = vadd.f32 %v1651, %v1699
  %v1701 = vpop.f32.mrb[0].mxu0
  %v1702 = vadd.f32 %v1651, %v1701
  %1703 = vdwg.mxu0
  %1704 = vmatprep.subr.bf16.mxu0 %v1640
  %1705 = vmatpush1.bf16.msra.mxu0 %v1639
  %1706 = vmatprep.subr.bf16.mxu0 0
  %1707 = vmatpush1.bf16.msra.mxu0 0
  %1708 = vmatprep.subr.bf16.mxu0 0
  %1709 = vmatpush1.bf16.msra.mxu0 0
  %1710 = vmatprep.subr.bf16.mxu0 0
  %1711 = vmatpush1.bf16.msra.mxu0 0
  %1712 = vmatprep.subr.bf16.mxu0 0
  %1713 = vmatpush1.bf16.msra.mxu0 0
  %1714 = vmatprep.subr.bf16.mxu0 0
  %1715 = vmatpush1.bf16.msra.mxu0 0
  %1716 = vmatprep.subr.bf16.mxu0 0
  %1717 = vmatpush1.bf16.msra.mxu0 0
  %1718 = vmatprep.subr.bf16.mxu0 0
  %1719 = vmatpush1.bf16.msra.mxu0 0
  %1720 = vmatprep.subr.bf16.mxu0 0
  %1721 = vmatpush1.bf16.msra.mxu0 0
  %1722 = vmatprep.subr.bf16.mxu0 0
  %1723 = vmatpush1.bf16.msra.mxu0 0
  %1724 = vmatprep.subr.bf16.mxu0 0
  %1725 = vmatpush1.bf16.msra.mxu0 0
  %1726 = vmatprep.subr.bf16.mxu0 0
  %1727 = vmatpush1.bf16.msra.mxu0 0
  %1728 = vmatprep.subr.bf16.mxu0 0
  %1729 = vmatpush1.bf16.msra.mxu0 0
  %1730 = vmatprep.subr.bf16.mxu0 0
  %1731 = vmatpush1.bf16.msra.mxu0 0
  %1732 = vmatprep.subr.bf16.mxu0 0
  %1733 = vmatpush1.bf16.msra.mxu0 0
  %1734 = vmatprep.subr.bf16.mxu0 0
  %1735 = vmatpush1.bf16.msra.mxu0 0
  %1736 = vmatprep.mubr.bf16.mxu0 0
  %1737 = vmatmul.mubr.bf16.gmra.mrb[0].mxu0 %v1659
  %v1738 = vpop.f32.mrb[0].mxu0
  %v1739 = vadd.f32 %v1646, %v1738
  %v1740 = vpop.f32.mrb[0].mxu0
  %v1741 = vadd.f32 %v1646, %v1740
  %v1742 = vpop.f32.mrb[0].mxu0
  %v1743 = vadd.f32 %v1651, %v1742
  %v1744 = vpop.f32.mrb[0].mxu0
  %v1745 = vadd.f32 %v1651, %v1744
  %1746 = vdwg.mxu0
  %1747 = vst [vmem:[%s11] sm:$0xff] %v1696
  %1748 = vst [vmem:[%s11 + $0x8] sm:$0xff] %v1698
  %1749 = vst [vmem:[%s11 + $0x10] sm:$0xff] %v1739
  %1750 = vst [vmem:[%s11 + $0x18] sm:$0xff] %v1741
  %1751 = vst [vmem:[%s11 + $0x20] sm:$0xff] %v1700
  %1752 = vst [vmem:[%s11 + $0x28] sm:$0xff] %v1702
  %1753 = vst [vmem:[%s11 + $0x30] sm:$0xff] %v1743
  %1754 = vst [vmem:[%s11 + $0x38] sm:$0xff] %v1745
  // Predicated region
  $region46: #{diffusion_model_forward.1} parent=0 // pred_check
    _
  $region47: #{diffusion_model_forward.1} parent=0 // pred_check_branch
    %1756 = sbr.rel (0) target = $region49
  $region48: #{diffusion_model_forward.1} parent=0 // pred_region
    _
  $region49: #{diffusion_model_forward.1} parent=0 // pred_fallthru
    _
  // Predicated region
  $region50: #{diffusion_model_forward.1} parent=0 // pred_check
    _
  $region51: #{diffusion_model_forward.1} parent=0 // pred_check_branch
    %1758 = sbr.rel (0) target = $region53
  $region52: #{diffusion_model_forward.1} parent=0 // pred_region
    _
  $region53: #{diffusion_model_forward.1} parent=0 // pred_fallthru
    _

</llo_original>
